<compile_context>
chip_gen: v7x
topology: tpu7x:2x2x1
jax: 0.10.0
libtpu: 0.0.40
codegen_flags: <defaults>
</compile_context>

<pallas_src>
import math
import functools

import jax
import jax.numpy as jnp
from jax import lax
from jax.experimental import pallas as pl
from jax.experimental.pallas import tpu as pltpu


# ---------------------------------------------------------------------------
# Pallas kernel: fused gather+projection prologue + fused bi-LSTM + head
# ---------------------------------------------------------------------------
def classifier_kernel(*refs, use_z: bool):
    if use_z:
        (x_ref, mslab_ref, scale_ref, tabproj_ref, whh_ref, b_ref,
         wout_ref, bout_ref, out_ref) = refs
    else:
        (x_ref, mslab_ref, tabproj_ref, whh_ref, b_ref,
         wout_ref, bout_ref, out_ref) = refs
        scale_ref = None

    T, Bp, G2 = mslab_ref.shape          # G2 = 2H (state width, fwd|bwd)
    H = G2 // 2
    G8 = 8 * H                           # 4 gate groups x 2H
    V = tabproj_ref.shape[0]
    TB = T * Bp

    # ---- fused embedding gather + input projection: ONE MXU matmul (bf16 operands) ----
    x_col = x_ref[...]                                            # [T*Bp, 1] int32 (time-major)
    vocab_ids = lax.broadcasted_iota(jnp.int32, (TB, V), 1)       # [T*Bp, V]
    onehot = (x_col == vocab_ids).astype(jnp.bfloat16)            # 0/1 exact in bf16
    gin_flat = jnp.dot(onehot, tabproj_ref[...],
                       preferred_element_type=jnp.float32)        # [T*Bp, 8H] f32 accum
    if use_z:
        gin_flat = gin_flat * scale_ref[...]                      # per-row (mask*z) scale
    gin_flat = gin_flat + b_ref[...]                              # bias added once
    gates_tm = gin_flat.reshape(T, Bp, G8)                        # time-major slab

    # fwd lanes = first H lanes of every 2H gate group (gate layout: i|f|o|g, fwd/bwd packed)
    lane = lax.broadcasted_iota(jnp.int32, (Bp, G8), 1)
    fwd_lane = (lane % G2) < H

    m_all = mslab_ref[...] > 0.0                                  # [T, Bp, 2H] hoisted mask slab

    whh = whh_ref[...]                                            # [2H, 8H] bf16 block-diagonal

    h = jnp.zeros((Bp, G2), jnp.float32)
    c = jnp.zeros((Bp, G2), jnp.float32)

    # fused, fully unrolled bi-directional recurrence: step s handles fwd t=s and bwd t=T-1-s
    for s in range(T):
        tb = T - 1 - s
        # combine fwd-time-s / bwd-time-tb input gates with one select (off the carry chain)
        gin = jnp.where(fwd_lane, gates_tm[s], gates_tm[tb])      # [Bp, 8H]
        gates = gin + jnp.dot(h.astype(jnp.bfloat16), whh,
                              preferred_element_type=jnp.float32)  # single MXU push / step

        sg = jax.nn.sigmoid(gates[:, 0:6 * H])                    # i | f | o  (6H lanes, EUP)
        g = jnp.tanh(gates[:, 6 * H:G8])                          # g          (2H lanes)
        i_g = sg[:, 0:G2]
        f_g = sg[:, G2:2 * G2]
        o_g = sg[:, 2 * G2:3 * G2]

        c_new = f_g * c + i_g * g
        h_new = o_g * jnp.tanh(c_new)

        # mask-gated carry (emulates pack_padded_sequence: pads don't update state)
        m = m_all[s]                                              # [Bp, 2H] fwd|bwd mask
        h = jnp.where(m, h_new, h)
        c = jnp.where(m, c_new, c)

    # head: final = [h_fwd | h_bwd]; y = sigmoid(final @ W_out + b_out)
    logits = jnp.dot(h, wout_ref[...], preferred_element_type=jnp.float32) + bout_ref[...]
    out_ref[...] = jax.nn.sigmoid(logits)                         # nonlinearity='sigmoid'


# ---------------------------------------------------------------------------
# One-time parameter packing for the kernel layout (outside the hot path)
# ---------------------------------------------------------------------------
def pack_params(params):
    H = params["whh_f"].shape[0]

    def interleave(w_f, w_b):
        # per-direction column order (i,f,g,o) -> [i_f i_b | f_f f_b | o_f o_b | g_f g_b]
        def reorder(w):  # (i,f,g,o) -> (i,f,o,g)
            return jnp.concatenate(
                [w[:, 0:H], w[:, H:2 * H], w[:, 3 * H:4 * H], w[:, 2 * H:3 * H]], axis=-1)
        wf = reorder(w_f).reshape(-1, 4, H)
        wb = reorder(w_b).reshape(-1, 4, H)
        return jnp.stack([wf, wb], axis=2).reshape(-1, 8 * H)

    wih_cat = interleave(params["wih_f"], params["wih_b"])                      # [E, 8H]
    # Fold the embedding table into the input projection (gather+proj = one matmul).
    table_proj = params["embedding"].astype(jnp.float32) @ wih_cat              # [V, 8H]

    zH = jnp.zeros_like(params["whh_f"])
    whh_blk = jnp.concatenate([interleave(params["whh_f"], zH),                 # rows 0:H  (h_f)
                               interleave(zH, params["whh_b"])], axis=0)        # rows H:2H (h_b)

    b_cat = interleave(params["b_f"], params["b_b"])                            # [1, 8H]

    return {
        "table_proj": table_proj.astype(jnp.bfloat16),   # bf16 MXU operand
        "whh_blk": whh_blk.astype(jnp.bfloat16),         # bf16 MXU operand
        "b_cat": b_cat.astype(jnp.float32),
        "w_out": params["w_out"].astype(jnp.float32),
        "b_out": params["b_out"].astype(jnp.float32),
    }


# ---------------------------------------------------------------------------
# Wrapper: batch padding + time-major glue + single (gridless) pallas_call
# ---------------------------------------------------------------------------
def classifier_forward(x, mask, packed, z=None):
    """x: [B, T] int token ids; mask: [B, T] bool; z: optional [B, T] float."""
    B, T = x.shape
    H = packed["whh_blk"].shape[0] // 2
    O = packed["w_out"].shape[1]

    B_pad = ((B + 7) // 8) * 8                 # sublane-aligned batch
    pad = B_pad - B

    x_p = jnp.pad(x.astype(jnp.int32), ((0, pad), (0, 0)))
    mask_f = mask.astype(jnp.float32)
    mask_p = jnp.pad(mask_f, ((0, pad), (0, 0)))          # padded rows: all-zero mask

    # time-major ids, row = t*B_pad + b
    x_tm = jnp.transpose(x_p, (1, 0)).reshape(T * B_pad, 1)

    # hoisted mask slab: lanes 0:H = fwd mask at t=s, lanes H:2H = bwd mask at t=T-1-s
    mask_tm = jnp.transpose(mask_p, (1, 0))               # [T, B_pad]
    m_fwd = jnp.broadcast_to(mask_tm[:, :, None], (T, B_pad, H))
    m_bwd = jnp.broadcast_to(mask_tm[::-1, :, None], (T, B_pad, H))
    m_slab = jnp.concatenate([m_fwd, m_bwd], axis=-1)     # [T, B_pad, 2H] float32

    args = [x_tm, m_slab]
    if z is not None:
        scale_p = jnp.pad(mask_f * z.astype(jnp.float32), ((0, pad), (0, 0)))
        scale_tm = jnp.transpose(scale_p, (1, 0)).reshape(T * B_pad, 1)
        args.append(scale_tm)
    args += [packed["table_proj"], packed["whh_blk"], packed["b_cat"],
             packed["w_out"], packed["b_out"]]

    vmem = pl.BlockSpec(memory_space=pltpu.MemorySpace.VMEM)
    y_pad = pl.pallas_call(
        functools.partial(classifier_kernel, use_z=(z is not None)),
        out_shape=jax.ShapeDtypeStruct((B_pad, O), jnp.float32),
        in_specs=[vmem] * len(args),
        out_specs=vmem,
    )(*args)
    return y_pad[:B]


# ---------------------------------------------------------------------------
# Pure-JAX f32 reference (same semantics) for the correctness check
# ---------------------------------------------------------------------------
def classifier_reference(x, mask, params, z=None):
    emb = jnp.take(params["embedding"], x, axis=0)
    mask_f = mask.astype(jnp.float32)
    if z is not None:
        emb = emb * (mask_f * z)[..., None]
    emb_tm = jnp.transpose(emb, (1, 0, 2)).astype(jnp.float32)
    mask_tm = jnp.transpose(mask_f, (1, 0))[..., None]

    H = params["whh_f"].shape[0]
    B = x.shape[0]

    def run_dir(wih, whh, b, reverse):
        def step(carry, inp):
            h, c = carry
            x_t, m_t = inp
            gates = x_t @ wih + h @ whh + b
            i = jax.nn.sigmoid(gates[:, 0:H])
            f = jax.nn.sigmoid(gates[:, H:2 * H])
            g = jnp.tanh(gates[:, 2 * H:3 * H])
            o = jax.nn.sigmoid(gates[:, 3 * H:4 * H])
            c_new = f * c + i * g
            h_new = o * jnp.tanh(c_new)
            h = m_t * h_new + (1.0 - m_t) * h
            c = m_t * c_new + (1.0 - m_t) * c
            return (h, c), None

        xs = (emb_tm[::-1], mask_tm[::-1]) if reverse else (emb_tm, mask_tm)
        (h, _), _ = lax.scan(step, (jnp.zeros((B, H)), jnp.zeros((B, H))), xs)
        return h

    h_f = run_dir(params["wih_f"], params["whh_f"], params["b_f"], False)
    h_b = run_dir(params["wih_b"], params["whh_b"], params["b_b"], True)
    final = jnp.concatenate([h_f, h_b], axis=-1)
    return jax.nn.sigmoid(final @ params["w_out"] + params["b_out"])


# ---------------------------------------------------------------------------
# Deterministic parameter construction (shapes implied by the module __init__)
# ---------------------------------------------------------------------------
def make_params(vocab=50, emb_size=32, hidden_size=32, output_size=1):
    key = jax.random.PRNGKey(0)
    ks = jax.random.split(key, 12)
    stdv = 1.0 / math.sqrt(hidden_size)
    stdv_out = 1.0 / math.sqrt(2 * hidden_size)

    def u(k, shape, s):
        return jax.random.uniform(k, shape, jnp.float32, minval=-s, maxval=s)

    params = {
        "embedding": jax.random.normal(ks[0], (vocab, emb_size), jnp.float32) * 0.1,
        # forward direction (PyTorch stores [4H,E]/[4H,H], gate order i,f,g,o; pre-transposed)
        "wih_f": u(ks[1], (emb_size, 4 * hidden_size), stdv),
        "whh_f": u(ks[2], (hidden_size, 4 * hidden_size), stdv),
        "b_f":   u(ks[3], (1, 4 * hidden_size), stdv) + u(ks[4], (1, 4 * hidden_size), stdv),
        # backward direction
        "wih_b": u(ks[5], (emb_size, 4 * hidden_size), stdv),
        "whh_b": u(ks[6], (hidden_size, 4 * hidden_size), stdv),
        "b_b":   u(ks[7], (1, 4 * hidden_size), stdv) + u(ks[8], (1, 4 * hidden_size), stdv),
        # output Linear(2H -> output_size)
        "w_out": u(ks[9], (2 * hidden_size, output_size), stdv_out),
        "b_out": u(ks[10], (1, output_size), stdv_out),
    }
    return params


if __name__ == "__main__":
    B, T = 2, 8
    V, E, H, O = 50, 32, 32, 1

    params = make_params(vocab=V, emb_size=E, hidden_size=H, output_size=O)
    packed = pack_params(params)       # one-time weight repack (fold + gate-group + bf16)

    key = jax.random.PRNGKey(0)
    kx, kz = jax.random.split(key)
    x = jax.random.randint(kx, (B, T), 0, V, dtype=jnp.int32)
    lengths = jnp.array([T, 5], dtype=jnp.int32)
    mask = jnp.arange(T)[None, :] < lengths[:, None]       # [B, T] bool

    fwd = jax.jit(classifier_forward)                      # fuses the tiny wrapper glue

    # z=None path
    y = jax.block_until_ready(fwd(x, mask, packed))
    y_ref = classifier_reference(x, mask, params, z=None)
    assert y.shape == (B, O)
    # bf16 MXU operands -> loosened tolerance vs the f32 reference (per perf review)
    assert bool(jnp.allclose(y, y_ref, atol=3e-2, rtol=3e-2)), \
        f"max|diff|={float(jnp.max(jnp.abs(y - y_ref)))}"

    # rationale-scaled path (z given)
    z = jax.random.uniform(kz, (B, T), jnp.float32)
    y_z = jax.block_until_ready(fwd(x, mask, packed, z))
    y_z_ref = classifier_reference(x, mask, params, z=z)
    assert bool(jnp.allclose(y_z, y_z_ref, atol=3e-2, rtol=3e-2)), \
        f"max|diff|={float(jnp.max(jnp.abs(y_z - y_z_ref)))}"

    print("KERNEL_OK")
</pallas_src>

<mosaic_0001>
module attributes {stable_mosaic.version = 11 : i64} {
  func.func @classifier_kernel(%arg0: memref<64x1xi32, #tpu.memory_space<vmem>>, %arg1: memref<8x8x64xf32, #tpu.memory_space<vmem>>, %arg2: memref<50x256xbf16, #tpu.memory_space<vmem>>, %arg3: memref<64x256xbf16, #tpu.memory_space<vmem>>, %arg4: memref<1x256xf32, #tpu.memory_space<vmem>>, %arg5: memref<64x1xf32, #tpu.memory_space<vmem>>, %arg6: memref<1x1xf32, #tpu.memory_space<vmem>>, %arg7: memref<8x1xf32, #tpu.memory_space<vmem>>) attributes {dimension_semantics = [], scalar_prefetch = 0 : i64, scratch_operands = 0 : i64, tpu.core_type = #tpu.core_type<tc>} {
    %c0 = arith.constant 0 : index
    %c0_0 = arith.constant 0 : index
    %0 = vector.load %arg0[%c0, %c0_0] : memref<64x1xi32, #tpu.memory_space<vmem>>, vector<64x1xi32>
    %1 = tpu.iota {dimensions = array<i32: 1>} : vector<64x50xi32>
    %2 = vector.broadcast %0 : vector<64x1xi32> to vector<64x50xi32>
    %3 = arith.cmpi eq, %2, %1 : vector<64x50xi32>
    %4 = arith.extui %3 : vector<64x50xi1> to vector<64x50xi32>
    %5 = arith.sitofp %4 : vector<64x50xi32> to vector<64x50xf32>
    %6 = arith.truncf %5 : vector<64x50xf32> to vector<64x50xbf16>
    %c0_1 = arith.constant 0 : index
    %c0_2 = arith.constant 0 : index
    %7 = vector.load %arg2[%c0_1, %c0_2] : memref<50x256xbf16, #tpu.memory_space<vmem>>, vector<50x256xbf16>
    %cst = arith.constant dense<0.000000e+00> : vector<64x256xf32>
    %8 = tpu.matmul %6, %7, %cst {dimension_numbers = #tpu.dot_dimension_numbers<[1], [0], [0], [1], [0, 0, 1, 1], [], []>} : vector<64x50xbf16>, vector<50x256xbf16>, vector<64x256xf32> -> vector<64x256xf32>
    %c0_3 = arith.constant 0 : index
    %c0_4 = arith.constant 0 : index
    %9 = vector.load %arg4[%c0_3, %c0_4] : memref<1x256xf32, #tpu.memory_space<vmem>>, vector<1x256xf32>
    %10 = vector.broadcast %9 : vector<1x256xf32> to vector<64x256xf32>
    %11 = arith.addf %8, %10 : vector<64x256xf32>
    %12 = vector.shape_cast %11 : vector<64x256xf32> to vector<8x8x256xf32>
    %13 = tpu.iota {dimensions = array<i32: 1>} : vector<8x256xi32>
    %c64_i32 = arith.constant 64 : i32
    %c0_i32 = arith.constant 0 : i32
    %14 = arith.cmpi eq, %c64_i32, %c0_i32 : i32
    %c1_i32 = arith.constant 1 : i32
    %15 = arith.select %14, %c1_i32, %c64_i32 : i32
    %16 = vector.broadcast %15 : i32 to vector<8x256xi32>
    %17 = arith.remsi %13, %16 : vector<8x256xi32>
    %c0_i32_5 = arith.constant 0 : i32
    %18 = vector.broadcast %c0_i32_5 : i32 to vector<8x256xi32>
    %19 = arith.cmpi ne, %17, %18 : vector<8x256xi32>
    %c0_i32_6 = arith.constant 0 : i32
    %20 = vector.broadcast %c0_i32_6 : i32 to vector<8x256xi32>
    %21 = arith.cmpi slt, %17, %20 : vector<8x256xi32>
    %c0_i32_7 = arith.constant 0 : i32
    %22 = arith.cmpi slt, %15, %c0_i32_7 : i32
    %23 = vector.broadcast %22 : i1 to vector<8x256xi1>
    %24 = vector.broadcast %23 : vector<8x256xi1> to vector<8x256xi1>
    %25 = arith.xori %21, %24 : vector<8x256xi1>
    %26 = arith.andi %25, %19 : vector<8x256xi1>
    %27 = vector.broadcast %15 : i32 to vector<8x256xi32>
    %28 = arith.addi %17, %27 : vector<8x256xi32>
    %29 = arith.select %26, %28, %17 : vector<8x256xi1>, vector<8x256xi32>
    %c32_i32 = arith.constant 32 : i32
    %30 = vector.broadcast %c32_i32 : i32 to vector<8x256xi32>
    %31 = arith.cmpi slt, %29, %30 : vector<8x256xi32>
    %c0_8 = arith.constant 0 : index
    %c0_9 = arith.constant 0 : index
    %c0_10 = arith.constant 0 : index
    %32 = vector.load %arg1[%c0_8, %c0_9, %c0_10] : memref<8x8x64xf32, #tpu.memory_space<vmem>>, vector<8x8x64xf32>
    %cst_11 = arith.constant 0.000000e+00 : f32
    %33 = vector.broadcast %cst_11 : f32 to vector<8x8x64xf32>
    %34 = arith.cmpf ogt, %32, %33 : vector<8x8x64xf32>
    %c0_12 = arith.constant 0 : index
    %c0_13 = arith.constant 0 : index
    %35 = vector.load %arg3[%c0_12, %c0_13] : memref<64x256xbf16, #tpu.memory_space<vmem>>, vector<64x256xbf16>
    %cst_14 = arith.constant 0.000000e+00 : f32
    %36 = vector.broadcast %cst_14 : f32 to vector<8x64xf32>
    %cst_15 = arith.constant 0.000000e+00 : f32
    %37 = vector.broadcast %cst_15 : f32 to vector<8x64xf32>
    %38 = vector.extract_strided_slice %12 {offsets = [0, 0, 0], sizes = [1, 8, 256], strides = [1, 1, 1]} : vector<8x8x256xf32> to vector<1x8x256xf32>
    %39 = vector.shape_cast %38 : vector<1x8x256xf32> to vector<8x256xf32>
    %40 = vector.extract_strided_slice %12 {offsets = [7, 0, 0], sizes = [1, 8, 256], strides = [1, 1, 1]} : vector<8x8x256xf32> to vector<1x8x256xf32>
    %41 = vector.shape_cast %40 : vector<1x8x256xf32> to vector<8x256xf32>
    %42 = arith.select %31, %39, %41 : vector<8x256xi1>, vector<8x256xf32>
    %43 = arith.truncf %36 : vector<8x64xf32> to vector<8x64xbf16>
    %cst_16 = arith.constant dense<0.000000e+00> : vector<8x256xf32>
    %44 = tpu.matmul %43, %35, %cst_16 {dimension_numbers = #tpu.dot_dimension_numbers<[1], [0], [0], [1], [0, 0, 1, 1], [], []>} : vector<8x64xbf16>, vector<64x256xbf16>, vector<8x256xf32> -> vector<8x256xf32>
    %45 = arith.addf %42, %44 : vector<8x256xf32>
    %46 = vector.extract_strided_slice %45 {offsets = [0, 0], sizes = [8, 192], strides = [1, 1]} : vector<8x256xf32> to vector<8x192xf32>
    %47 = arith.negf %46 : vector<8x192xf32>
    %48 = math.exp %47 : vector<8x192xf32>
    %cst_17 = arith.constant 1.000000e+00 : f32
    %49 = vector.broadcast %cst_17 : f32 to vector<8x192xf32>
    %50 = arith.addf %49, %48 : vector<8x192xf32>
    %51 = arith.divf %49, %50 : vector<8x192xf32>
    %52 = vector.extract_strided_slice %45 {offsets = [0, 192], sizes = [8, 64], strides = [1, 1]} : vector<8x256xf32> to vector<8x64xf32>
    %53 = math.tanh %52 : vector<8x64xf32>
    %54 = vector.extract_strided_slice %51 {offsets = [0, 0], sizes = [8, 64], strides = [1, 1]} : vector<8x192xf32> to vector<8x64xf32>
    %55 = vector.extract_strided_slice %51 {offsets = [0, 64], sizes = [8, 64], strides = [1, 1]} : vector<8x192xf32> to vector<8x64xf32>
    %56 = vector.extract_strided_slice %51 {offsets = [0, 128], sizes = [8, 64], strides = [1, 1]} : vector<8x192xf32> to vector<8x64xf32>
    %57 = arith.mulf %55, %37 : vector<8x64xf32>
    %58 = arith.mulf %54, %53 : vector<8x64xf32>
    %59 = arith.addf %57, %58 : vector<8x64xf32>
    %60 = math.tanh %59 : vector<8x64xf32>
    %61 = arith.mulf %56, %60 : vector<8x64xf32>
    %62 = vector.extract_strided_slice %34 {offsets = [0, 0, 0], sizes = [1, 8, 64], strides = [1, 1, 1]} : vector<8x8x64xi1> to vector<1x8x64xi1>
    %63 = vector.shape_cast %62 : vector<1x8x64xi1> to vector<8x64xi1>
    %64 = arith.select %63, %61, %36 : vector<8x64xi1>, vector<8x64xf32>
    %65 = arith.select %63, %59, %37 : vector<8x64xi1>, vector<8x64xf32>
    %66 = vector.extract_strided_slice %12 {offsets = [1, 0, 0], sizes = [1, 8, 256], strides = [1, 1, 1]} : vector<8x8x256xf32> to vector<1x8x256xf32>
    %67 = vector.shape_cast %66 : vector<1x8x256xf32> to vector<8x256xf32>
    %68 = vector.extract_strided_slice %12 {offsets = [6, 0, 0], sizes = [1, 8, 256], strides = [1, 1, 1]} : vector<8x8x256xf32> to vector<1x8x256xf32>
    %69 = vector.shape_cast %68 : vector<1x8x256xf32> to vector<8x256xf32>
    %70 = arith.select %31, %67, %69 : vector<8x256xi1>, vector<8x256xf32>
    %71 = arith.truncf %64 : vector<8x64xf32> to vector<8x64xbf16>
    %cst_18 = arith.constant dense<0.000000e+00> : vector<8x256xf32>
    %72 = tpu.matmul %71, %35, %cst_18 {dimension_numbers = #tpu.dot_dimension_numbers<[1], [0], [0], [1], [0, 0, 1, 1], [], []>} : vector<8x64xbf16>, vector<64x256xbf16>, vector<8x256xf32> -> vector<8x256xf32>
    %73 = arith.addf %70, %72 : vector<8x256xf32>
    %74 = vector.extract_strided_slice %73 {offsets = [0, 0], sizes = [8, 192], strides = [1, 1]} : vector<8x256xf32> to vector<8x192xf32>
    %75 = arith.negf %74 : vector<8x192xf32>
    %76 = math.exp %75 : vector<8x192xf32>
    %cst_19 = arith.constant 1.000000e+00 : f32
    %77 = vector.broadcast %cst_19 : f32 to vector<8x192xf32>
    %78 = arith.addf %77, %76 : vector<8x192xf32>
    %79 = arith.divf %77, %78 : vector<8x192xf32>
    %80 = vector.extract_strided_slice %73 {offsets = [0, 192], sizes = [8, 64], strides = [1, 1]} : vector<8x256xf32> to vector<8x64xf32>
    %81 = math.tanh %80 : vector<8x64xf32>
    %82 = vector.extract_strided_slice %79 {offsets = [0, 0], sizes = [8, 64], strides = [1, 1]} : vector<8x192xf32> to vector<8x64xf32>
    %83 = vector.extract_strided_slice %79 {offsets = [0, 64], sizes = [8, 64], strides = [1, 1]} : vector<8x192xf32> to vector<8x64xf32>
    %84 = vector.extract_strided_slice %79 {offsets = [0, 128], sizes = [8, 64], strides = [1, 1]} : vector<8x192xf32> to vector<8x64xf32>
    %85 = arith.mulf %83, %65 : vector<8x64xf32>
    %86 = arith.mulf %82, %81 : vector<8x64xf32>
    %87 = arith.addf %85, %86 : vector<8x64xf32>
    %88 = math.tanh %87 : vector<8x64xf32>
    %89 = arith.mulf %84, %88 : vector<8x64xf32>
    %90 = vector.extract_strided_slice %34 {offsets = [1, 0, 0], sizes = [1, 8, 64], strides = [1, 1, 1]} : vector<8x8x64xi1> to vector<1x8x64xi1>
    %91 = vector.shape_cast %90 : vector<1x8x64xi1> to vector<8x64xi1>
    %92 = arith.select %91, %89, %64 : vector<8x64xi1>, vector<8x64xf32>
    %93 = arith.select %91, %87, %65 : vector<8x64xi1>, vector<8x64xf32>
    %94 = vector.extract_strided_slice %12 {offsets = [2, 0, 0], sizes = [1, 8, 256], strides = [1, 1, 1]} : vector<8x8x256xf32> to vector<1x8x256xf32>
    %95 = vector.shape_cast %94 : vector<1x8x256xf32> to vector<8x256xf32>
    %96 = vector.extract_strided_slice %12 {offsets = [5, 0, 0], sizes = [1, 8, 256], strides = [1, 1, 1]} : vector<8x8x256xf32> to vector<1x8x256xf32>
    %97 = vector.shape_cast %96 : vector<1x8x256xf32> to vector<8x256xf32>
    %98 = arith.select %31, %95, %97 : vector<8x256xi1>, vector<8x256xf32>
    %99 = arith.truncf %92 : vector<8x64xf32> to vector<8x64xbf16>
    %cst_20 = arith.constant dense<0.000000e+00> : vector<8x256xf32>
    %100 = tpu.matmul %99, %35, %cst_20 {dimension_numbers = #tpu.dot_dimension_numbers<[1], [0], [0], [1], [0, 0, 1, 1], [], []>} : vector<8x64xbf16>, vector<64x256xbf16>, vector<8x256xf32> -> vector<8x256xf32>
    %101 = arith.addf %98, %100 : vector<8x256xf32>
    %102 = vector.extract_strided_slice %101 {offsets = [0, 0], sizes = [8, 192], strides = [1, 1]} : vector<8x256xf32> to vector<8x192xf32>
    %103 = arith.negf %102 : vector<8x192xf32>
    %104 = math.exp %103 : vector<8x192xf32>
    %cst_21 = arith.constant 1.000000e+00 : f32
    %105 = vector.broadcast %cst_21 : f32 to vector<8x192xf32>
    %106 = arith.addf %105, %104 : vector<8x192xf32>
    %107 = arith.divf %105, %106 : vector<8x192xf32>
    %108 = vector.extract_strided_slice %101 {offsets = [0, 192], sizes = [8, 64], strides = [1, 1]} : vector<8x256xf32> to vector<8x64xf32>
    %109 = math.tanh %108 : vector<8x64xf32>
    %110 = vector.extract_strided_slice %107 {offsets = [0, 0], sizes = [8, 64], strides = [1, 1]} : vector<8x192xf32> to vector<8x64xf32>
    %111 = vector.extract_strided_slice %107 {offsets = [0, 64], sizes = [8, 64], strides = [1, 1]} : vector<8x192xf32> to vector<8x64xf32>
    %112 = vector.extract_strided_slice %107 {offsets = [0, 128], sizes = [8, 64], strides = [1, 1]} : vector<8x192xf32> to vector<8x64xf32>
    %113 = arith.mulf %111, %93 : vector<8x64xf32>
    %114 = arith.mulf %110, %109 : vector<8x64xf32>
    %115 = arith.addf %113, %114 : vector<8x64xf32>
    %116 = math.tanh %115 : vector<8x64xf32>
    %117 = arith.mulf %112, %116 : vector<8x64xf32>
    %118 = vector.extract_strided_slice %34 {offsets = [2, 0, 0], sizes = [1, 8, 64], strides = [1, 1, 1]} : vector<8x8x64xi1> to vector<1x8x64xi1>
    %119 = vector.shape_cast %118 : vector<1x8x64xi1> to vector<8x64xi1>
    %120 = arith.select %119, %117, %92 : vector<8x64xi1>, vector<8x64xf32>
    %121 = arith.select %119, %115, %93 : vector<8x64xi1>, vector<8x64xf32>
    %122 = vector.extract_strided_slice %12 {offsets = [3, 0, 0], sizes = [1, 8, 256], strides = [1, 1, 1]} : vector<8x8x256xf32> to vector<1x8x256xf32>
    %123 = vector.shape_cast %122 : vector<1x8x256xf32> to vector<8x256xf32>
    %124 = vector.extract_strided_slice %12 {offsets = [4, 0, 0], sizes = [1, 8, 256], strides = [1, 1, 1]} : vector<8x8x256xf32> to vector<1x8x256xf32>
    %125 = vector.shape_cast %124 : vector<1x8x256xf32> to vector<8x256xf32>
    %126 = arith.select %31, %123, %125 : vector<8x256xi1>, vector<8x256xf32>
    %127 = arith.truncf %120 : vector<8x64xf32> to vector<8x64xbf16>
    %cst_22 = arith.constant dense<0.000000e+00> : vector<8x256xf32>
    %128 = tpu.matmul %127, %35, %cst_22 {dimension_numbers = #tpu.dot_dimension_numbers<[1], [0], [0], [1], [0, 0, 1, 1], [], []>} : vector<8x64xbf16>, vector<64x256xbf16>, vector<8x256xf32> -> vector<8x256xf32>
    %129 = arith.addf %126, %128 : vector<8x256xf32>
    %130 = vector.extract_strided_slice %129 {offsets = [0, 0], sizes = [8, 192], strides = [1, 1]} : vector<8x256xf32> to vector<8x192xf32>
    %131 = arith.negf %130 : vector<8x192xf32>
    %132 = math.exp %131 : vector<8x192xf32>
    %cst_23 = arith.constant 1.000000e+00 : f32
    %133 = vector.broadcast %cst_23 : f32 to vector<8x192xf32>
    %134 = arith.addf %133, %132 : vector<8x192xf32>
    %135 = arith.divf %133, %134 : vector<8x192xf32>
    %136 = vector.extract_strided_slice %129 {offsets = [0, 192], sizes = [8, 64], strides = [1, 1]} : vector<8x256xf32> to vector<8x64xf32>
    %137 = math.tanh %136 : vector<8x64xf32>
    %138 = vector.extract_strided_slice %135 {offsets = [0, 0], sizes = [8, 64], strides = [1, 1]} : vector<8x192xf32> to vector<8x64xf32>
    %139 = vector.extract_strided_slice %135 {offsets = [0, 64], sizes = [8, 64], strides = [1, 1]} : vector<8x192xf32> to vector<8x64xf32>
    %140 = vector.extract_strided_slice %135 {offsets = [0, 128], sizes = [8, 64], strides = [1, 1]} : vector<8x192xf32> to vector<8x64xf32>
    %141 = arith.mulf %139, %121 : vector<8x64xf32>
    %142 = arith.mulf %138, %137 : vector<8x64xf32>
    %143 = arith.addf %141, %142 : vector<8x64xf32>
    %144 = math.tanh %143 : vector<8x64xf32>
    %145 = arith.mulf %140, %144 : vector<8x64xf32>
    %146 = vector.extract_strided_slice %34 {offsets = [3, 0, 0], sizes = [1, 8, 64], strides = [1, 1, 1]} : vector<8x8x64xi1> to vector<1x8x64xi1>
    %147 = vector.shape_cast %146 : vector<1x8x64xi1> to vector<8x64xi1>
    %148 = arith.select %147, %145, %120 : vector<8x64xi1>, vector<8x64xf32>
    %149 = arith.select %147, %143, %121 : vector<8x64xi1>, vector<8x64xf32>
    %150 = vector.extract_strided_slice %12 {offsets = [4, 0, 0], sizes = [1, 8, 256], strides = [1, 1, 1]} : vector<8x8x256xf32> to vector<1x8x256xf32>
    %151 = vector.shape_cast %150 : vector<1x8x256xf32> to vector<8x256xf32>
    %152 = vector.extract_strided_slice %12 {offsets = [3, 0, 0], sizes = [1, 8, 256], strides = [1, 1, 1]} : vector<8x8x256xf32> to vector<1x8x256xf32>
    %153 = vector.shape_cast %152 : vector<1x8x256xf32> to vector<8x256xf32>
    %154 = arith.select %31, %151, %153 : vector<8x256xi1>, vector<8x256xf32>
    %155 = arith.truncf %148 : vector<8x64xf32> to vector<8x64xbf16>
    %cst_24 = arith.constant dense<0.000000e+00> : vector<8x256xf32>
    %156 = tpu.matmul %155, %35, %cst_24 {dimension_numbers = #tpu.dot_dimension_numbers<[1], [0], [0], [1], [0, 0, 1, 1], [], []>} : vector<8x64xbf16>, vector<64x256xbf16>, vector<8x256xf32> -> vector<8x256xf32>
    %157 = arith.addf %154, %156 : vector<8x256xf32>
    %158 = vector.extract_strided_slice %157 {offsets = [0, 0], sizes = [8, 192], strides = [1, 1]} : vector<8x256xf32> to vector<8x192xf32>
    %159 = arith.negf %158 : vector<8x192xf32>
    %160 = math.exp %159 : vector<8x192xf32>
    %cst_25 = arith.constant 1.000000e+00 : f32
    %161 = vector.broadcast %cst_25 : f32 to vector<8x192xf32>
    %162 = arith.addf %161, %160 : vector<8x192xf32>
    %163 = arith.divf %161, %162 : vector<8x192xf32>
    %164 = vector.extract_strided_slice %157 {offsets = [0, 192], sizes = [8, 64], strides = [1, 1]} : vector<8x256xf32> to vector<8x64xf32>
    %165 = math.tanh %164 : vector<8x64xf32>
    %166 = vector.extract_strided_slice %163 {offsets = [0, 0], sizes = [8, 64], strides = [1, 1]} : vector<8x192xf32> to vector<8x64xf32>
    %167 = vector.extract_strided_slice %163 {offsets = [0, 64], sizes = [8, 64], strides = [1, 1]} : vector<8x192xf32> to vector<8x64xf32>
    %168 = vector.extract_strided_slice %163 {offsets = [0, 128], sizes = [8, 64], strides = [1, 1]} : vector<8x192xf32> to vector<8x64xf32>
    %169 = arith.mulf %167, %149 : vector<8x64xf32>
    %170 = arith.mulf %166, %165 : vector<8x64xf32>
    %171 = arith.addf %169, %170 : vector<8x64xf32>
    %172 = math.tanh %171 : vector<8x64xf32>
    %173 = arith.mulf %168, %172 : vector<8x64xf32>
    %174 = vector.extract_strided_slice %34 {offsets = [4, 0, 0], sizes = [1, 8, 64], strides = [1, 1, 1]} : vector<8x8x64xi1> to vector<1x8x64xi1>
    %175 = vector.shape_cast %174 : vector<1x8x64xi1> to vector<8x64xi1>
    %176 = arith.select %175, %173, %148 : vector<8x64xi1>, vector<8x64xf32>
    %177 = arith.select %175, %171, %149 : vector<8x64xi1>, vector<8x64xf32>
    %178 = vector.extract_strided_slice %12 {offsets = [5, 0, 0], sizes = [1, 8, 256], strides = [1, 1, 1]} : vector<8x8x256xf32> to vector<1x8x256xf32>
    %179 = vector.shape_cast %178 : vector<1x8x256xf32> to vector<8x256xf32>
    %180 = vector.extract_strided_slice %12 {offsets = [2, 0, 0], sizes = [1, 8, 256], strides = [1, 1, 1]} : vector<8x8x256xf32> to vector<1x8x256xf32>
    %181 = vector.shape_cast %180 : vector<1x8x256xf32> to vector<8x256xf32>
    %182 = arith.select %31, %179, %181 : vector<8x256xi1>, vector<8x256xf32>
    %183 = arith.truncf %176 : vector<8x64xf32> to vector<8x64xbf16>
    %cst_26 = arith.constant dense<0.000000e+00> : vector<8x256xf32>
    %184 = tpu.matmul %183, %35, %cst_26 {dimension_numbers = #tpu.dot_dimension_numbers<[1], [0], [0], [1], [0, 0, 1, 1], [], []>} : vector<8x64xbf16>, vector<64x256xbf16>, vector<8x256xf32> -> vector<8x256xf32>
    %185 = arith.addf %182, %184 : vector<8x256xf32>
    %186 = vector.extract_strided_slice %185 {offsets = [0, 0], sizes = [8, 192], strides = [1, 1]} : vector<8x256xf32> to vector<8x192xf32>
    %187 = arith.negf %186 : vector<8x192xf32>
    %188 = math.exp %187 : vector<8x192xf32>
    %cst_27 = arith.constant 1.000000e+00 : f32
    %189 = vector.broadcast %cst_27 : f32 to vector<8x192xf32>
    %190 = arith.addf %189, %188 : vector<8x192xf32>
    %191 = arith.divf %189, %190 : vector<8x192xf32>
    %192 = vector.extract_strided_slice %185 {offsets = [0, 192], sizes = [8, 64], strides = [1, 1]} : vector<8x256xf32> to vector<8x64xf32>
    %193 = math.tanh %192 : vector<8x64xf32>
    %194 = vector.extract_strided_slice %191 {offsets = [0, 0], sizes = [8, 64], strides = [1, 1]} : vector<8x192xf32> to vector<8x64xf32>
    %195 = vector.extract_strided_slice %191 {offsets = [0, 64], sizes = [8, 64], strides = [1, 1]} : vector<8x192xf32> to vector<8x64xf32>
    %196 = vector.extract_strided_slice %191 {offsets = [0, 128], sizes = [8, 64], strides = [1, 1]} : vector<8x192xf32> to vector<8x64xf32>
    %197 = arith.mulf %195, %177 : vector<8x64xf32>
    %198 = arith.mulf %194, %193 : vector<8x64xf32>
    %199 = arith.addf %197, %198 : vector<8x64xf32>
    %200 = math.tanh %199 : vector<8x64xf32>
    %201 = arith.mulf %196, %200 : vector<8x64xf32>
    %202 = vector.extract_strided_slice %34 {offsets = [5, 0, 0], sizes = [1, 8, 64], strides = [1, 1, 1]} : vector<8x8x64xi1> to vector<1x8x64xi1>
    %203 = vector.shape_cast %202 : vector<1x8x64xi1> to vector<8x64xi1>
    %204 = arith.select %203, %201, %176 : vector<8x64xi1>, vector<8x64xf32>
    %205 = arith.select %203, %199, %177 : vector<8x64xi1>, vector<8x64xf32>
    %206 = vector.extract_strided_slice %12 {offsets = [6, 0, 0], sizes = [1, 8, 256], strides = [1, 1, 1]} : vector<8x8x256xf32> to vector<1x8x256xf32>
    %207 = vector.shape_cast %206 : vector<1x8x256xf32> to vector<8x256xf32>
    %208 = vector.extract_strided_slice %12 {offsets = [1, 0, 0], sizes = [1, 8, 256], strides = [1, 1, 1]} : vector<8x8x256xf32> to vector<1x8x256xf32>
    %209 = vector.shape_cast %208 : vector<1x8x256xf32> to vector<8x256xf32>
    %210 = arith.select %31, %207, %209 : vector<8x256xi1>, vector<8x256xf32>
    %211 = arith.truncf %204 : vector<8x64xf32> to vector<8x64xbf16>
    %cst_28 = arith.constant dense<0.000000e+00> : vector<8x256xf32>
    %212 = tpu.matmul %211, %35, %cst_28 {dimension_numbers = #tpu.dot_dimension_numbers<[1], [0], [0], [1], [0, 0, 1, 1], [], []>} : vector<8x64xbf16>, vector<64x256xbf16>, vector<8x256xf32> -> vector<8x256xf32>
    %213 = arith.addf %210, %212 : vector<8x256xf32>
    %214 = vector.extract_strided_slice %213 {offsets = [0, 0], sizes = [8, 192], strides = [1, 1]} : vector<8x256xf32> to vector<8x192xf32>
    %215 = arith.negf %214 : vector<8x192xf32>
    %216 = math.exp %215 : vector<8x192xf32>
    %cst_29 = arith.constant 1.000000e+00 : f32
    %217 = vector.broadcast %cst_29 : f32 to vector<8x192xf32>
    %218 = arith.addf %217, %216 : vector<8x192xf32>
    %219 = arith.divf %217, %218 : vector<8x192xf32>
    %220 = vector.extract_strided_slice %213 {offsets = [0, 192], sizes = [8, 64], strides = [1, 1]} : vector<8x256xf32> to vector<8x64xf32>
    %221 = math.tanh %220 : vector<8x64xf32>
    %222 = vector.extract_strided_slice %219 {offsets = [0, 0], sizes = [8, 64], strides = [1, 1]} : vector<8x192xf32> to vector<8x64xf32>
    %223 = vector.extract_strided_slice %219 {offsets = [0, 64], sizes = [8, 64], strides = [1, 1]} : vector<8x192xf32> to vector<8x64xf32>
    %224 = vector.extract_strided_slice %219 {offsets = [0, 128], sizes = [8, 64], strides = [1, 1]} : vector<8x192xf32> to vector<8x64xf32>
    %225 = arith.mulf %223, %205 : vector<8x64xf32>
    %226 = arith.mulf %222, %221 : vector<8x64xf32>
    %227 = arith.addf %225, %226 : vector<8x64xf32>
    %228 = math.tanh %227 : vector<8x64xf32>
    %229 = arith.mulf %224, %228 : vector<8x64xf32>
    %230 = vector.extract_strided_slice %34 {offsets = [6, 0, 0], sizes = [1, 8, 64], strides = [1, 1, 1]} : vector<8x8x64xi1> to vector<1x8x64xi1>
    %231 = vector.shape_cast %230 : vector<1x8x64xi1> to vector<8x64xi1>
    %232 = arith.select %231, %229, %204 : vector<8x64xi1>, vector<8x64xf32>
    %233 = arith.select %231, %227, %205 : vector<8x64xi1>, vector<8x64xf32>
    %234 = vector.extract_strided_slice %12 {offsets = [7, 0, 0], sizes = [1, 8, 256], strides = [1, 1, 1]} : vector<8x8x256xf32> to vector<1x8x256xf32>
    %235 = vector.shape_cast %234 : vector<1x8x256xf32> to vector<8x256xf32>
    %236 = vector.extract_strided_slice %12 {offsets = [0, 0, 0], sizes = [1, 8, 256], strides = [1, 1, 1]} : vector<8x8x256xf32> to vector<1x8x256xf32>
    %237 = vector.shape_cast %236 : vector<1x8x256xf32> to vector<8x256xf32>
    %238 = arith.select %31, %235, %237 : vector<8x256xi1>, vector<8x256xf32>
    %239 = arith.truncf %232 : vector<8x64xf32> to vector<8x64xbf16>
    %cst_30 = arith.constant dense<0.000000e+00> : vector<8x256xf32>
    %240 = tpu.matmul %239, %35, %cst_30 {dimension_numbers = #tpu.dot_dimension_numbers<[1], [0], [0], [1], [0, 0, 1, 1], [], []>} : vector<8x64xbf16>, vector<64x256xbf16>, vector<8x256xf32> -> vector<8x256xf32>
    %241 = arith.addf %238, %240 : vector<8x256xf32>
    %242 = vector.extract_strided_slice %241 {offsets = [0, 0], sizes = [8, 192], strides = [1, 1]} : vector<8x256xf32> to vector<8x192xf32>
    %243 = arith.negf %242 : vector<8x192xf32>
    %244 = math.exp %243 : vector<8x192xf32>
    %cst_31 = arith.constant 1.000000e+00 : f32
    %245 = vector.broadcast %cst_31 : f32 to vector<8x192xf32>
    %246 = arith.addf %245, %244 : vector<8x192xf32>
    %247 = arith.divf %245, %246 : vector<8x192xf32>
    %248 = vector.extract_strided_slice %241 {offsets = [0, 192], sizes = [8, 64], strides = [1, 1]} : vector<8x256xf32> to vector<8x64xf32>
    %249 = math.tanh %248 : vector<8x64xf32>
    %250 = vector.extract_strided_slice %247 {offsets = [0, 0], sizes = [8, 64], strides = [1, 1]} : vector<8x192xf32> to vector<8x64xf32>
    %251 = vector.extract_strided_slice %247 {offsets = [0, 64], sizes = [8, 64], strides = [1, 1]} : vector<8x192xf32> to vector<8x64xf32>
    %252 = vector.extract_strided_slice %247 {offsets = [0, 128], sizes = [8, 64], strides = [1, 1]} : vector<8x192xf32> to vector<8x64xf32>
    %253 = arith.mulf %251, %233 : vector<8x64xf32>
    %254 = arith.mulf %250, %249 : vector<8x64xf32>
    %255 = arith.addf %253, %254 : vector<8x64xf32>
    %256 = math.tanh %255 : vector<8x64xf32>
    %257 = arith.mulf %252, %256 : vector<8x64xf32>
    %258 = vector.extract_strided_slice %34 {offsets = [7, 0, 0], sizes = [1, 8, 64], strides = [1, 1, 1]} : vector<8x8x64xi1> to vector<1x8x64xi1>
    %259 = vector.shape_cast %258 : vector<1x8x64xi1> to vector<8x64xi1>
    %260 = arith.select %259, %257, %232 : vector<8x64xi1>, vector<8x64xf32>
    %c0_32 = arith.constant 0 : index
    %c0_33 = arith.constant 0 : index
    %261 = vector.load %arg5[%c0_32, %c0_33] : memref<64x1xf32, #tpu.memory_space<vmem>>, vector<64x1xf32>
    %cst_34 = arith.constant dense<0.000000e+00> : vector<8x1xf32>
    %262 = tpu.matmul %260, %261, %cst_34 {dimension_numbers = #tpu.dot_dimension_numbers<[1], [0], [0], [1], [0, 0, 1, 1], [], []>} : vector<8x64xf32>, vector<64x1xf32>, vector<8x1xf32> -> vector<8x1xf32>
    %c0_35 = arith.constant 0 : index
    %c0_36 = arith.constant 0 : index
    %263 = vector.load %arg6[%c0_35, %c0_36] : memref<1x1xf32, #tpu.memory_space<vmem>>, vector<1x1xf32>
    %264 = vector.broadcast %263 : vector<1x1xf32> to vector<8x1xf32>
    %265 = arith.addf %262, %264 : vector<8x1xf32>
    %266 = arith.negf %265 : vector<8x1xf32>
    %267 = math.exp %266 : vector<8x1xf32>
    %cst_37 = arith.constant 1.000000e+00 : f32
    %268 = vector.broadcast %cst_37 : f32 to vector<8x1xf32>
    %269 = arith.addf %268, %267 : vector<8x1xf32>
    %270 = arith.divf %268, %269 : vector<8x1xf32>
    %c0_38 = arith.constant 0 : index
    %c0_39 = arith.constant 0 : index
    %271 = vector.load %arg7[%c0_38, %c0_39] : memref<8x1xf32, #tpu.memory_space<vmem>>, vector<8x1xf32>
    tpu.vector_store %arg7[%c0_38, %c0_39], %270 {strides = array<i32>} : memref<8x1xf32, #tpu.memory_space<vmem>>, vector<8x1xf32>,
    return
  }
}

</mosaic_0001>

<llo_original>
// kernel: classifier_forward.1
$region0: #{classifier_forward.1}
  #allocation0 [shape = 'u32[]', space=smem, size = 0x4, offset = 0x4, fixed_abs, tag = 'smem constant byte address 0x4 - core index']
  #allocation1 [shape = 'u32[144,128]{1,0:T(1,128)}', space=vmem, size = 0x12000, scoped, tag = 'internal scratch']
  #allocation2 [shape = 'f32[1,1]{1,0:T(1,128)S(1)}', space=vmem, size = 0x200, scoped, tag = 'scoped memory for classifier_forward.1']
  %s0 = inlined_call_operand.vmem [shape: s32[64,1], index: 0, kind: input, shape index: {}]
  %s1 = inlined_call_operand.vmem [shape: f32[8,8,64], index: 1, kind: input, shape index: {}]
  %s2 = inlined_call_operand.vmem [shape: bf16[50,256], index: 2, kind: input, shape index: {}]
  %s3 = inlined_call_operand.vmem [shape: bf16[64,256], index: 3, kind: input, shape index: {}]
  %s4 = inlined_call_operand.vmem [shape: f32[1,256], index: 4, kind: input, shape index: {}]
  %s5 = inlined_call_operand.vmem [shape: f32[64,1], index: 5, kind: input, shape index: {}]
  %s6 = inlined_call_operand.<no memory space> [shape: f32[1,1], index: 6, kind: input, shape index: {}]
  %s7 = inlined_call_operand.vmem [shape: f32[8,1], index: 7, kind: output, shape index: {}]
  %s8 = sld [smem:[#allocation0]]
  $region38: #{classifier_forward.1} parent=0
    _
  %s10 = ssub.s32 1, %s8
  %s11 = scalar_select 0, %s10, %s8
  %v12 = vstv %s6
  %13 = vst [vmem:[#allocation2] sm:$0x1] %v12
  // Predicated region
  $region2: #{classifier_forward.1} parent=0 // pred_check
    _
  $region3: #{classifier_forward.1} parent=0 // pred_check_branch
    %15 = sbr.rel (0) target = $region5
  $region4: #{classifier_forward.1} parent=0 // pred_region
    _
  $region5: #{classifier_forward.1} parent=0 // pred_fallthru
    _
  // Predicated region
  $region6: #{classifier_forward.1} parent=0 // pred_check
    _
  $region7: #{classifier_forward.1} parent=0 // pred_check_branch
    %17 = sbr.rel (0) target = $region9
  $region8: #{classifier_forward.1} parent=0 // pred_region
    _
  $region9: #{classifier_forward.1} parent=0 // pred_fallthru
    _
  // Predicated region
  $region10: #{classifier_forward.1} parent=0 // pred_check
    _
  $region11: #{classifier_forward.1} parent=0 // pred_check_branch
    %19 = sbr.rel (0) target = $region13
  $region12: #{classifier_forward.1} parent=0 // pred_region
    _
  $region13: #{classifier_forward.1} parent=0 // pred_fallthru
    _
  // Predicated region
  $region14: #{classifier_forward.1} parent=0 // pred_check
    _
  $region15: #{classifier_forward.1} parent=0 // pred_check_branch
    %21 = sbr.rel (0) target = $region17
  $region16: #{classifier_forward.1} parent=0 // pred_region
    _
  $region17: #{classifier_forward.1} parent=0 // pred_fallthru
    _
  // Predicated region
  $region18: #{classifier_forward.1} parent=0 // pred_check
    _
  $region19: #{classifier_forward.1} parent=0 // pred_check_branch
    %23 = sbr.rel (0) target = $region21
  $region20: #{classifier_forward.1} parent=0 // pred_region
    _
  $region21: #{classifier_forward.1} parent=0 // pred_fallthru
    _
  // Predicated region
  $region22: #{classifier_forward.1} parent=0 // pred_check
    _
  $region23: #{classifier_forward.1} parent=0 // pred_check_branch
    %25 = sbr.rel (0) target = $region25
  $region24: #{classifier_forward.1} parent=0 // pred_region
    _
  $region25: #{classifier_forward.1} parent=0 // pred_fallthru
    _
  // Predicated region
  $region26: #{classifier_forward.1} parent=0 // pred_check
    _
  $region27: #{classifier_forward.1} parent=0 // pred_check_branch
    %27 = sbr.rel (0) target = $region29
  $region28: #{classifier_forward.1} parent=0 // pred_region
    _
  $region29: #{classifier_forward.1} parent=0 // pred_fallthru
    _
  %v29 = vld [vmem:[%s0] sm:$0xff]
  %v30 = vld [vmem:[%s0 + $0x8] sm:$0xff]
  %v31 = vld [vmem:[%s0 + $0x10] sm:$0xff]
  %v32 = vld [vmem:[%s0 + $0x18] sm:$0xff]
  %v33 = vld [vmem:[%s0 + $0x20] sm:$0xff]
  %v34 = vld [vmem:[%s0 + $0x28] sm:$0xff]
  %v35 = vld [vmem:[%s0 + $0x30] sm:$0xff]
  %v36 = vld [vmem:[%s0 + $0x38] sm:$0xff]
  %v37 = vlaneseq
  %v38 = vand.u32 %v37, 127
  %39 = vset.pattern.permute.xlu0 0
  %40 = vperm.xlu0 %39, %v29
  %v41 = vpop.permute.xlu0 %40
  %42 = vset.pattern.permute.xlu0 0
  %43 = vperm.xlu0 %42, %v30
  %v44 = vpop.permute.xlu0 %43
  %45 = vset.pattern.permute.xlu0 0
  %46 = vperm.xlu0 %45, %v31
  %v47 = vpop.permute.xlu0 %46
  %48 = vset.pattern.permute.xlu0 0
  %49 = vperm.xlu0 %48, %v32
  %v50 = vpop.permute.xlu0 %49
  %51 = vset.pattern.permute.xlu0 0
  %52 = vperm.xlu0 %51, %v33
  %v53 = vpop.permute.xlu0 %52
  %54 = vset.pattern.permute.xlu0 0
  %55 = vperm.xlu0 %54, %v34
  %v56 = vpop.permute.xlu0 %55
  %57 = vset.pattern.permute.xlu0 0
  %58 = vperm.xlu0 %57, %v35
  %v59 = vpop.permute.xlu0 %58
  %60 = vset.pattern.permute.xlu0 0
  %61 = vperm.xlu0 %60, %v36
  %v62 = vpop.permute.xlu0 %61
  %vm63 = vcmp.eq.s32.totalorder %v41, %v38
  %vm64 = vcmp.eq.s32.totalorder %v44, %v38
  %vm65 = vcmp.eq.s32.totalorder %v47, %v38
  %vm66 = vcmp.eq.s32.totalorder %v50, %v38
  %vm67 = vcmp.eq.s32.totalorder %v53, %v38
  %vm68 = vcmp.eq.s32.totalorder %v56, %v38
  %vm69 = vcmp.eq.s32.totalorder %v59, %v38
  %vm70 = vcmp.eq.s32.totalorder %v62, %v38
  %v71 = vsel %vm63, 1, 0
  %v72 = vsel %vm64, 1, 0
  %v73 = vsel %vm65, 1, 0
  %v74 = vsel %vm66, 1, 0
  %v75 = vsel %vm67, 1, 0
  %v76 = vsel %vm68, 1, 0
  %v77 = vsel %vm69, 1, 0
  %v78 = vsel %vm70, 1, 0
  %v79 = vcvt.s32.f32 %v71
  %v80 = vcvt.s32.f32 %v72
  %v81 = vcvt.s32.f32 %v73
  %v82 = vcvt.s32.f32 %v74
  %v83 = vcvt.s32.f32 %v75
  %v84 = vcvt.s32.f32 %v76
  %v85 = vcvt.s32.f32 %v77
  %v86 = vcvt.s32.f32 %v78
  %v87 = vpack.c.bf16 %v80, %v79
  %v88 = vpack.c.bf16 %v82, %v81
  %v89 = vpack.c.bf16 %v84, %v83
  %v90 = vpack.c.bf16 %v86, %v85
  %v91 = vld [vmem:[%s2] sm:$0xff]
  %v92 = vld [vmem:[%s2 + $0x8] sm:$0xff]
  %v93 = vld [vmem:[%s2 + $0x10] sm:$0xff]
  %v94 = vld [vmem:[%s2 + $0x18] sm:$0xff]
  %v95 = vld [vmem:[%s2 + $0x20] sm:$0xff]
  %v96 = vld [vmem:[%s2 + $0x28] sm:$0xff]
  %v97 = vld [vmem:[%s2 + $0x30] sm:$0x11]
  %v98 = vld [vmem:[%s4] sm:$0x3]
  %v100 = vlaneseq
  %v101 = vshrl.u32 %v100, 7
  %v102 = vsub.s32 0, %v101
  %v103 = vrot.slane %v98, %v102
  %v104 = vlaneseq
  %v105 = vshrl.u32 %v104, 7
  %v106 = vsub.s32 1, %v105
  %v107 = vrot.slane %v98, %v106
  %v117 = vunpack.c.l.b16 %v91
  %v118 = vunpack.c.h.b16 %v91
  %v119 = vunpack.c.l.b16 %v92
  %v120 = vunpack.c.h.b16 %v92
  %v121 = vunpack.c.l.b16 %v93
  %v122 = vunpack.c.h.b16 %v93
  %v123 = vunpack.c.l.b16 %v94
  %v124 = vunpack.c.h.b16 %v94
  %v125 = vunpack.c.l.b16 %v95
  %v126 = vunpack.c.h.b16 %v95
  %v127 = vunpack.c.l.b16 %v96
  %v128 = vunpack.c.h.b16 %v96
  %v129 = vunpack.c.l.b16 %v97
  %v130 = vunpack.c.h.b16 %v97
  %v131 = vpack.c.b16 %v119, %v117
  %v132 = vpack.c.b16 %v120, %v118
  %v133 = vpack.c.b16 %v123, %v121
  %v134 = vpack.c.b16 %v124, %v122
  %v135 = vpack.c.b16 %v127, %v125
  %v136 = vpack.c.b16 %v128, %v126
  %v137 = vpack.c.b16 %v129, %v129
  %v138 = vpack.c.b16 %v130, %v130
  %vm145 = vcmask 408576
  %v147 = vsel %vm145, %v87, 0
  %v150 = vsel %vm145, %v88, 0
  %v153 = vsel %vm145, %v89, 0
  %v156 = vsel %vm145, %v90, 0
  %vm158 = vcmask 1040384
  %v160 = vsel %vm158, %v137, 0
  %v163 = vsel %vm158, %v138, 0
  %165 = vmatprep.subr.bf16.mxu0 %v132
  %166 = vmatpush1.bf16.msra.mxu0 %v131
  %167 = vmatprep.subr.bf16.mxu0 %v134
  %168 = vmatpush1.bf16.msra.mxu0 %v133
  %169 = vmatprep.subr.bf16.mxu0 %v136
  %170 = vmatpush1.bf16.msra.mxu0 %v135
  %171 = vmatprep.subr.bf16.mxu0 %v163
  %172 = vmatpush1.bf16.msra.mxu0 %v160
  %173 = vmatprep.subr.bf16.mxu0 0
  %174 = vmatpush1.bf16.msra.mxu0 0
  %175 = vmatprep.subr.bf16.mxu0 0
  %176 = vmatpush1.bf16.msra.mxu0 0
  %177 = vmatprep.subr.bf16.mxu0 0
  %178 = vmatpush1.bf16.msra.mxu0 0
  %179 = vmatprep.subr.bf16.mxu0 0
  %180 = vmatpush1.bf16.msra.mxu0 0
  %181 = vmatprep.subr.bf16.mxu0 0
  %182 = vmatpush1.bf16.msra.mxu0 0
  %183 = vmatprep.subr.bf16.mxu0 0
  %184 = vmatpush1.bf16.msra.mxu0 0
  %185 = vmatprep.subr.bf16.mxu0 0
  %186 = vmatpush1.bf16.msra.mxu0 0
  %187 = vmatprep.subr.bf16.mxu0 0
  %188 = vmatpush1.bf16.msra.mxu0 0
  %189 = vmatprep.subr.bf16.mxu0 0
  %190 = vmatpush1.bf16.msra.mxu0 0
  %191 = vmatprep.subr.bf16.mxu0 0
  %192 = vmatpush1.bf16.msra.mxu0 0
  %193 = vmatprep.subr.bf16.mxu0 0
  %194 = vmatpush1.bf16.msra.mxu0 0
  %195 = vmatprep.subr.bf16.mxu0 0
  %196 = vmatpush1.bf16.msra.mxu0 0
  %197 = vmatprep.mubr.bf16.mxu0 0
  %198 = vmatmul.mubr.bf16.gmra.mrb[0].mxu0 %v147
  %v199 = vpop.f32.mrb[0].mxu0
  %v200 = vadd.f32 %v103, %v199
  %v201 = vpop.f32.mrb[0].mxu0
  %v202 = vadd.f32 %v107, %v201
  %v203 = vpop.f32.mrb[0].mxu0
  %v204 = vadd.f32 %v103, %v203
  %v205 = vpop.f32.mrb[0].mxu0
  %v206 = vadd.f32 %v107, %v205
  %207 = vmatprep.mubr.bf16.mxu0 0
  %208 = vmatmul.mubr.bf16.gmra.mrb[0].mxu0 %v150
  %v209 = vpop.f32.mrb[0].mxu0
  %v210 = vadd.f32 %v103, %v209
  %v211 = vpop.f32.mrb[0].mxu0
  %v212 = vadd.f32 %v107, %v211
  %v213 = vpop.f32.mrb[0].mxu0
  %v214 = vadd.f32 %v103, %v213
  %v215 = vpop.f32.mrb[0].mxu0
  %v216 = vadd.f32 %v107, %v215
  %217 = vmatprep.mubr.bf16.mxu0 0
  %218 = vmatmul.mubr.bf16.gmra.mrb[0].mxu0 %v153
  %v219 = vpop.f32.mrb[0].mxu0
  %v220 = vadd.f32 %v103, %v219
  %v221 = vpop.f32.mrb[0].mxu0
  %v222 = vadd.f32 %v107, %v221
  %v223 = vpop.f32.mrb[0].mxu0
  %v224 = vadd.f32 %v103, %v223
  %v225 = vpop.f32.mrb[0].mxu0
  %v226 = vadd.f32 %v107, %v225
  %227 = vmatprep.mubr.bf16.mxu0 0
  %228 = vmatmul.mubr.bf16.gmra.mrb[0].mxu0 %v156
  %v229 = vpop.f32.mrb[0].mxu0
  %v230 = vadd.f32 %v103, %v229
  %v231 = vpop.f32.mrb[0].mxu0
  %v232 = vadd.f32 %v107, %v231
  %v233 = vpop.f32.mrb[0].mxu0
  %v234 = vadd.f32 %v103, %v233
  %v235 = vpop.f32.mrb[0].mxu0
  %v236 = vadd.f32 %v107, %v235
  %237 = vdwg.mxu0
  %v238 = vadd.s32 %v38, 128
  %vm239 = vcmp.lt.s32.totalorder %v38, 0
  %v240 = vsub.s32 0, %v38
  %v241 = vsel %vm239, %v240, %v38
  %v242 = vshrl.u32 %v241, 6
  %v243 = vand.u32 %v241, 63
  %v244 = vsub.s32 0, %v243
  %v245 = vsel %vm239, %v244, %v243
  %vm246 = vcmp.lt.s32.totalorder %v238, 0
  %v247 = vsub.s32 0, %v238
  %v248 = vsel %vm246, %v247, %v238
  %v249 = vshrl.u32 %v248, 6
  %v250 = vand.u32 %v248, 63
  %v251 = vsub.s32 0, %v250
  %v252 = vsel %vm246, %v251, %v250
  %vm253 = vcmp.ne.s32.totalorder %v245, 0
  %vm254 = vcmp.ne.s32.totalorder %v252, 0
  %vm255 = vcmp.lt.s32.totalorder %v245, 0
  %vm256 = vcmp.lt.s32.totalorder %v252, 0
  %vm257 = vmand %vm255, %vm253
  %vm258 = vmand %vm256, %vm254
  %v259 = vadd.s32 %v245, 64
  %v260 = vadd.s32 %v252, 64
  %v261 = vsel %vm257, %v259, %v245
  %v262 = vsel %vm258, %v260, %v252
  %vm263 = vcmp.lt.s32.totalorder %v261, 32
  %vm264 = vcmp.lt.s32.totalorder %v262, 32
  %v265 = vld [vmem:[%s1] sm:$0xff]
  %v266 = vld [vmem:[%s1 + $0x8] sm:$0xff]
  %v267 = vld [vmem:[%s1 + $0x10] sm:$0xff]
  %v268 = vld [vmem:[%s1 + $0x18] sm:$0xff]
  %v269 = vld [vmem:[%s1 + $0x20] sm:$0xff]
  %v270 = vld [vmem:[%s1 + $0x28] sm:$0xff]
  %v271 = vld [vmem:[%s1 + $0x30] sm:$0xff]
  %v272 = vld [vmem:[%s1 + $0x38] sm:$0xff]
  %vm273 = vcmp.gt.f32.partialorder %v265, 0.0
  %vm274 = vcmp.gt.f32.partialorder %v266, 0.0
  %vm275 = vcmp.gt.f32.partialorder %v267, 0.0
  %vm276 = vcmp.gt.f32.partialorder %v268, 0.0
  %vm277 = vcmp.gt.f32.partialorder %v269, 0.0
  %vm278 = vcmp.gt.f32.partialorder %v270, 0.0
  %vm279 = vcmp.gt.f32.partialorder %v271, 0.0
  %vm280 = vcmp.gt.f32.partialorder %v272, 0.0
  %v281 = vld [vmem:[%s3] sm:$0xff]
  %v282 = vld [vmem:[%s3 + $0x8] sm:$0xff]
  %v283 = vld [vmem:[%s3 + $0x10] sm:$0xff]
  %v284 = vld [vmem:[%s3 + $0x18] sm:$0xff]
  %v285 = vld [vmem:[%s3 + $0x20] sm:$0xff]
  %v286 = vld [vmem:[%s3 + $0x28] sm:$0xff]
  %v287 = vld [vmem:[%s3 + $0x30] sm:$0xff]
  %v288 = vld [vmem:[%s3 + $0x38] sm:$0xff]
  %v289 = vsel %vm263, %v200, %v234
  %v290 = vsel %vm264, %v202, %v236
  %v299 = vunpack.c.l.b16 %v281
  %v300 = vunpack.c.h.b16 %v281
  %v301 = vunpack.c.l.b16 %v282
  %v302 = vunpack.c.h.b16 %v282
  %v303 = vunpack.c.l.b16 %v283
  %v304 = vunpack.c.h.b16 %v283
  %v305 = vunpack.c.l.b16 %v284
  %v306 = vunpack.c.h.b16 %v284
  %v307 = vunpack.c.l.b16 %v285
  %v308 = vunpack.c.h.b16 %v285
  %v309 = vunpack.c.l.b16 %v286
  %v310 = vunpack.c.h.b16 %v286
  %v311 = vunpack.c.l.b16 %v287
  %v312 = vunpack.c.h.b16 %v287
  %v313 = vunpack.c.l.b16 %v288
  %v314 = vunpack.c.h.b16 %v288
  %v315 = vpack.c.b16 %v301, %v299
  %v316 = vpack.c.b16 %v302, %v300
  %v317 = vpack.c.b16 %v305, %v303
  %v318 = vpack.c.b16 %v306, %v304
  %v319 = vpack.c.b16 %v309, %v307
  %v320 = vpack.c.b16 %v310, %v308
  %v321 = vpack.c.b16 %v313, %v311
  %v322 = vpack.c.b16 %v314, %v312
  %vm331 = vcmask 523264
  %v333 = vsel %vm331, 0, 0
  %335 = vmatprep.subr.bf16.mxu0 %v316
  %336 = vmatpush1.bf16.msra.mxu0 %v315
  %337 = vmatprep.subr.bf16.mxu0 %v318
  %338 = vmatpush1.bf16.msra.mxu0 %v317
  %339 = vmatprep.subr.bf16.mxu0 %v320
  %340 = vmatpush1.bf16.msra.mxu0 %v319
  %341 = vmatprep.subr.bf16.mxu0 %v322
  %342 = vmatpush1.bf16.msra.mxu0 %v321
  %343 = vmatprep.subr.bf16.mxu0 0
  %344 = vmatpush1.bf16.msra.mxu0 0
  %345 = vmatprep.subr.bf16.mxu0 0
  %346 = vmatpush1.bf16.msra.mxu0 0
  %347 = vmatprep.subr.bf16.mxu0 0
  %348 = vmatpush1.bf16.msra.mxu0 0
  %349 = vmatprep.subr.bf16.mxu0 0
  %350 = vmatpush1.bf16.msra.mxu0 0
  %351 = vmatprep.subr.bf16.mxu0 0
  %352 = vmatpush1.bf16.msra.mxu0 0
  %353 = vmatprep.subr.bf16.mxu0 0
  %354 = vmatpush1.bf16.msra.mxu0 0
  %355 = vmatprep.subr.bf16.mxu0 0
  %356 = vmatpush1.bf16.msra.mxu0 0
  %357 = vmatprep.subr.bf16.mxu0 0
  %358 = vmatpush1.bf16.msra.mxu0 0
  %359 = vmatprep.subr.bf16.mxu0 0
  %360 = vmatpush1.bf16.msra.mxu0 0
  %361 = vmatprep.subr.bf16.mxu0 0
  %362 = vmatpush1.bf16.msra.mxu0 0
  %363 = vmatprep.subr.bf16.mxu0 0
  %364 = vmatpush1.bf16.msra.mxu0 0
  %365 = vmatprep.subr.bf16.mxu0 0
  %366 = vmatpush1.bf16.msra.mxu0 0
  %367 = vmatprep.mubr.bf16.mxu0 0
  %368 = vmatmul.mubr.bf16.gmra.mrb[0].mxu0 %v333
  %v369 = vpop.f32.mrb[0].mxu0
  %v370 = vadd.f32 0.0, %v369
  %v371 = vpop.f32.mrb[0].mxu0
  %v372 = vadd.f32 0.0, %v371
  %v373 = vpop.f32.mrb[0].mxu0
  %v374 = vpop.f32.mrb[0].mxu0
  %375 = vdwg.mxu0
  %v376 = vadd.f32 %v289, %v370
  %v377 = vadd.f32 %v290, %v372
  %v378 = vxor.u32 %v376, 2147483648
  %v379 = vxor.u32 %v377, 2147483648
  %v380 = vmul.f32 %v378, 1.442695
  %v381 = vpow.pop %v380
  %v382 = vmul.f32 %v379, 1.442695
  %v383 = vpow.pop %v382
  %v384 = vadd.f32 %v381, 1.0
  %v385 = vadd.f32 %v383, 1.0
  %v386 = vrcp.pop %v384
  %v387 = vmul.f32 1.0, %v386
  %v388 = vrcp.pop %v385
  %v389 = vmul.f32 1.0, %v388
  %v390 = vtanh.pop %v377
  %v391 = vmul.f32 %v387, 0.0
  %393 = vrot.lane.b32.xlu0 %v390, 64
  %v394 = vpop.permute.xlu0 %393
  %v396 = vmul.f32 %v387, %v394
  %398 = vrot.lane.b32.xlu0 %v396, 64
  %v399 = vpop.permute.xlu0 %398
  %v401 = vadd.f32 %v391, %v399
  %v402 = vtanh.pop %v401
  %404 = vrot.lane.b32.xlu0 %v402, 64
  %v405 = vpop.permute.xlu0 %404
  %v407 = vmul.f32 %v389, %v405
  %v408 = vsel %vm273, %v407, 0.0
  %410 = vrot.lane.b32.xlu0 %v401, 64
  %v411 = vpop.permute.xlu0 %410
  %v413 = vsel %vm273, %v411, 0.0
  %v414 = vsel %vm263, %v204, %v230
  %v415 = vsel %vm264, %v206, %v232
  %v416 = vpack.c.bf16 %v408, %v408
  %v418 = vsel %vm331, %v416, 0
  %420 = vmatprep.subr.bf16.mxu0 %v316
  %421 = vmatpush1.bf16.msra.mxu0 %v315
  %422 = vmatprep.subr.bf16.mxu0 %v318
  %423 = vmatpush1.bf16.msra.mxu0 %v317
  %424 = vmatprep.subr.bf16.mxu0 %v320
  %425 = vmatpush1.bf16.msra.mxu0 %v319
  %426 = vmatprep.subr.bf16.mxu0 %v322
  %427 = vmatpush1.bf16.msra.mxu0 %v321
  %428 = vmatprep.subr.bf16.mxu0 0
  %429 = vmatpush1.bf16.msra.mxu0 0
  %430 = vmatprep.subr.bf16.mxu0 0
  %431 = vmatpush1.bf16.msra.mxu0 0
  %432 = vmatprep.subr.bf16.mxu0 0
  %433 = vmatpush1.bf16.msra.mxu0 0
  %434 = vmatprep.subr.bf16.mxu0 0
  %435 = vmatpush1.bf16.msra.mxu0 0
  %436 = vmatprep.subr.bf16.mxu0 0
  %437 = vmatpush1.bf16.msra.mxu0 0
  %438 = vmatprep.subr.bf16.mxu0 0
  %439 = vmatpush1.bf16.msra.mxu0 0
  %440 = vmatprep.subr.bf16.mxu0 0
  %441 = vmatpush1.bf16.msra.mxu0 0
  %442 = vmatprep.subr.bf16.mxu0 0
  %443 = vmatpush1.bf16.msra.mxu0 0
  %444 = vmatprep.subr.bf16.mxu0 0
  %445 = vmatpush1.bf16.msra.mxu0 0
  %446 = vmatprep.subr.bf16.mxu0 0
  %447 = vmatpush1.bf16.msra.mxu0 0
  %448 = vmatprep.subr.bf16.mxu0 0
  %449 = vmatpush1.bf16.msra.mxu0 0
  %450 = vmatprep.subr.bf16.mxu0 0
  %451 = vmatpush1.bf16.msra.mxu0 0
  %452 = vmatprep.mubr.bf16.mxu0 0
  %453 = vmatmul.mubr.bf16.gmra.mrb[0].mxu0 %v418
  %v454 = vpop.f32.mrb[0].mxu0
  %v455 = vadd.f32 0.0, %v454
  %v456 = vpop.f32.mrb[0].mxu0
  %v457 = vadd.f32 0.0, %v456
  %v458 = vpop.f32.mrb[0].mxu0
  %v459 = vpop.f32.mrb[0].mxu0
  %460 = vdwg.mxu0
  %v461 = vadd.f32 %v414, %v455
  %v462 = vadd.f32 %v415, %v457
  %v463 = vxor.u32 %v461, 2147483648
  %v464 = vxor.u32 %v462, 2147483648
  %v465 = vmul.f32 %v463, 1.442695
  %v466 = vpow.pop %v465
  %v467 = vmul.f32 %v464, 1.442695
  %v468 = vpow.pop %v467
  %v469 = vadd.f32 %v466, 1.0
  %v470 = vadd.f32 %v468, 1.0
  %v471 = vrcp.pop %v469
  %v472 = vmul.f32 1.0, %v471
  %v473 = vrcp.pop %v470
  %v474 = vmul.f32 1.0, %v473
  %v475 = vtanh.pop %v462
  %477 = vrot.lane.b32.xlu0 %v413, 64
  %v478 = vpop.permute.xlu0 %477
  %v480 = vmul.f32 %v472, %v478
  %482 = vrot.lane.b32.xlu0 %v475, 64
  %v483 = vpop.permute.xlu0 %482
  %v485 = vmul.f32 %v472, %v483
  %487 = vrot.lane.b32.xlu0 %v485, 64
  %v488 = vpop.permute.xlu0 %487
  %v490 = vadd.f32 %v480, %v488
  %v491 = vtanh.pop %v490
  %493 = vrot.lane.b32.xlu0 %v491, 64
  %v494 = vpop.permute.xlu0 %493
  %v496 = vmul.f32 %v474, %v494
  %v497 = vsel %vm274, %v496, %v408
  %499 = vrot.lane.b32.xlu0 %v490, 64
  %v500 = vpop.permute.xlu0 %499
  %v502 = vsel %vm274, %v500, %v413
  %v503 = vsel %vm263, %v210, %v224
  %v504 = vsel %vm264, %v212, %v226
  %v505 = vpack.c.bf16 %v497, %v497
  %v507 = vsel %vm331, %v505, 0
  %509 = vmatprep.subr.bf16.mxu0 %v316
  %510 = vmatpush1.bf16.msra.mxu0 %v315
  %511 = vmatprep.subr.bf16.mxu0 %v318
  %512 = vmatpush1.bf16.msra.mxu0 %v317
  %513 = vmatprep.subr.bf16.mxu0 %v320
  %514 = vmatpush1.bf16.msra.mxu0 %v319
  %515 = vmatprep.subr.bf16.mxu0 %v322
  %516 = vmatpush1.bf16.msra.mxu0 %v321
  %517 = vmatprep.subr.bf16.mxu0 0
  %518 = vmatpush1.bf16.msra.mxu0 0
  %519 = vmatprep.subr.bf16.mxu0 0
  %520 = vmatpush1.bf16.msra.mxu0 0
  %521 = vmatprep.subr.bf16.mxu0 0
  %522 = vmatpush1.bf16.msra.mxu0 0
  %523 = vmatprep.subr.bf16.mxu0 0
  %524 = vmatpush1.bf16.msra.mxu0 0
  %525 = vmatprep.subr.bf16.mxu0 0
  %526 = vmatpush1.bf16.msra.mxu0 0
  %527 = vmatprep.subr.bf16.mxu0 0
  %528 = vmatpush1.bf16.msra.mxu0 0
  %529 = vmatprep.subr.bf16.mxu0 0
  %530 = vmatpush1.bf16.msra.mxu0 0
  %531 = vmatprep.subr.bf16.mxu0 0
  %532 = vmatpush1.bf16.msra.mxu0 0
  %533 = vmatprep.subr.bf16.mxu0 0
  %534 = vmatpush1.bf16.msra.mxu0 0
  %535 = vmatprep.subr.bf16.mxu0 0
  %536 = vmatpush1.bf16.msra.mxu0 0
  %537 = vmatprep.subr.bf16.mxu0 0
  %538 = vmatpush1.bf16.msra.mxu0 0
  %539 = vmatprep.subr.bf16.mxu0 0
  %540 = vmatpush1.bf16.msra.mxu0 0
  %541 = vmatprep.mubr.bf16.mxu0 0
  %542 = vmatmul.mubr.bf16.gmra.mrb[0].mxu0 %v507
  %v543 = vpop.f32.mrb[0].mxu0
  %v544 = vadd.f32 0.0, %v543
  %v545 = vpop.f32.mrb[0].mxu0
  %v546 = vadd.f32 0.0, %v545
  %v547 = vpop.f32.mrb[0].mxu0
  %v548 = vpop.f32.mrb[0].mxu0
  %549 = vdwg.mxu0
  %v550 = vadd.f32 %v503, %v544
  %v551 = vadd.f32 %v504, %v546
  %v552 = vxor.u32 %v550, 2147483648
  %v553 = vxor.u32 %v551, 2147483648
  %v554 = vmul.f32 %v552, 1.442695
  %v555 = vpow.pop %v554
  %v556 = vmul.f32 %v553, 1.442695
  %v557 = vpow.pop %v556
  %v558 = vadd.f32 %v555, 1.0
  %v559 = vadd.f32 %v557, 1.0
  %v560 = vrcp.pop %v558
  %v561 = vmul.f32 1.0, %v560
  %v562 = vrcp.pop %v559
  %v563 = vmul.f32 1.0, %v562
  %v564 = vtanh.pop %v551
  %566 = vrot.lane.b32.xlu0 %v502, 64
  %v567 = vpop.permute.xlu0 %566
  %v569 = vmul.f32 %v561, %v567
  %571 = vrot.lane.b32.xlu0 %v564, 64
  %v572 = vpop.permute.xlu0 %571
  %v574 = vmul.f32 %v561, %v572
  %576 = vrot.lane.b32.xlu0 %v574, 64
  %v577 = vpop.permute.xlu0 %576
  %v579 = vadd.f32 %v569, %v577
  %v580 = vtanh.pop %v579
  %582 = vrot.lane.b32.xlu0 %v580, 64
  %v583 = vpop.permute.xlu0 %582
  %v585 = vmul.f32 %v563, %v583
  %v586 = vsel %vm275, %v585, %v497
  %588 = vrot.lane.b32.xlu0 %v579, 64
  %v589 = vpop.permute.xlu0 %588
  %v591 = vsel %vm275, %v589, %v502
  %v592 = vsel %vm263, %v214, %v220
  %v593 = vsel %vm264, %v216, %v222
  %v594 = vpack.c.bf16 %v586, %v586
  %v596 = vsel %vm331, %v594, 0
  %598 = vmatprep.subr.bf16.mxu0 %v316
  %599 = vmatpush1.bf16.msra.mxu0 %v315
  %600 = vmatprep.subr.bf16.mxu0 %v318
  %601 = vmatpush1.bf16.msra.mxu0 %v317
  %602 = vmatprep.subr.bf16.mxu0 %v320
  %603 = vmatpush1.bf16.msra.mxu0 %v319
  %604 = vmatprep.subr.bf16.mxu0 %v322
  %605 = vmatpush1.bf16.msra.mxu0 %v321
  %606 = vmatprep.subr.bf16.mxu0 0
  %607 = vmatpush1.bf16.msra.mxu0 0
  %608 = vmatprep.subr.bf16.mxu0 0
  %609 = vmatpush1.bf16.msra.mxu0 0
  %610 = vmatprep.subr.bf16.mxu0 0
  %611 = vmatpush1.bf16.msra.mxu0 0
  %612 = vmatprep.subr.bf16.mxu0 0
  %613 = vmatpush1.bf16.msra.mxu0 0
  %614 = vmatprep.subr.bf16.mxu0 0
  %615 = vmatpush1.bf16.msra.mxu0 0
  %616 = vmatprep.subr.bf16.mxu0 0
  %617 = vmatpush1.bf16.msra.mxu0 0
  %618 = vmatprep.subr.bf16.mxu0 0
  %619 = vmatpush1.bf16.msra.mxu0 0
  %620 = vmatprep.subr.bf16.mxu0 0
  %621 = vmatpush1.bf16.msra.mxu0 0
  %622 = vmatprep.subr.bf16.mxu0 0
  %623 = vmatpush1.bf16.msra.mxu0 0
  %624 = vmatprep.subr.bf16.mxu0 0
  %625 = vmatpush1.bf16.msra.mxu0 0
  %626 = vmatprep.subr.bf16.mxu0 0
  %627 = vmatpush1.bf16.msra.mxu0 0
  %628 = vmatprep.subr.bf16.mxu0 0
  %629 = vmatpush1.bf16.msra.mxu0 0
  %630 = vmatprep.mubr.bf16.mxu0 0
  %631 = vmatmul.mubr.bf16.gmra.mrb[0].mxu0 %v596
  %v632 = vpop.f32.mrb[0].mxu0
  %v633 = vadd.f32 0.0, %v632
  %v634 = vpop.f32.mrb[0].mxu0
  %v635 = vadd.f32 0.0, %v634
  %v636 = vpop.f32.mrb[0].mxu0
  %v637 = vpop.f32.mrb[0].mxu0
  %638 = vdwg.mxu0
  %v639 = vadd.f32 %v592, %v633
  %v640 = vadd.f32 %v593, %v635
  %v641 = vxor.u32 %v639, 2147483648
  %v642 = vxor.u32 %v640, 2147483648
  %v643 = vmul.f32 %v641, 1.442695
  %v644 = vpow.pop %v643
  %v645 = vmul.f32 %v642, 1.442695
  %v646 = vpow.pop %v645
  %v647 = vadd.f32 %v644, 1.0
  %v648 = vadd.f32 %v646, 1.0
  %v649 = vrcp.pop %v647
  %v650 = vmul.f32 1.0, %v649
  %v651 = vrcp.pop %v648
  %v652 = vmul.f32 1.0, %v651
  %v653 = vtanh.pop %v640
  %655 = vrot.lane.b32.xlu0 %v591, 64
  %v656 = vpop.permute.xlu0 %655
  %v658 = vmul.f32 %v650, %v656
  %660 = vrot.lane.b32.xlu0 %v653, 64
  %v661 = vpop.permute.xlu0 %660
  %v663 = vmul.f32 %v650, %v661
  %665 = vrot.lane.b32.xlu0 %v663, 64
  %v666 = vpop.permute.xlu0 %665
  %v668 = vadd.f32 %v658, %v666
  %v669 = vtanh.pop %v668
  %671 = vrot.lane.b32.xlu0 %v669, 64
  %v672 = vpop.permute.xlu0 %671
  %v674 = vmul.f32 %v652, %v672
  %v675 = vsel %vm276, %v674, %v586
  %677 = vrot.lane.b32.xlu0 %v668, 64
  %v678 = vpop.permute.xlu0 %677
  %v680 = vsel %vm276, %v678, %v591
  %v681 = vsel %vm263, %v220, %v214
  %v682 = vsel %vm264, %v222, %v216
  %v683 = vpack.c.bf16 %v675, %v675
  %v685 = vsel %vm331, %v683, 0
  %687 = vmatprep.subr.bf16.mxu0 %v316
  %688 = vmatpush1.bf16.msra.mxu0 %v315
  %689 = vmatprep.subr.bf16.mxu0 %v318
  %690 = vmatpush1.bf16.msra.mxu0 %v317
  %691 = vmatprep.subr.bf16.mxu0 %v320
  %692 = vmatpush1.bf16.msra.mxu0 %v319
  %693 = vmatprep.subr.bf16.mxu0 %v322
  %694 = vmatpush1.bf16.msra.mxu0 %v321
  %695 = vmatprep.subr.bf16.mxu0 0
  %696 = vmatpush1.bf16.msra.mxu0 0
  %697 = vmatprep.subr.bf16.mxu0 0
  %698 = vmatpush1.bf16.msra.mxu0 0
  %699 = vmatprep.subr.bf16.mxu0 0
  %700 = vmatpush1.bf16.msra.mxu0 0
  %701 = vmatprep.subr.bf16.mxu0 0
  %702 = vmatpush1.bf16.msra.mxu0 0
  %703 = vmatprep.subr.bf16.mxu0 0
  %704 = vmatpush1.bf16.msra.mxu0 0
  %705 = vmatprep.subr.bf16.mxu0 0
  %706 = vmatpush1.bf16.msra.mxu0 0
  %707 = vmatprep.subr.bf16.mxu0 0
  %708 = vmatpush1.bf16.msra.mxu0 0
  %709 = vmatprep.subr.bf16.mxu0 0
  %710 = vmatpush1.bf16.msra.mxu0 0
  %711 = vmatprep.subr.bf16.mxu0 0
  %712 = vmatpush1.bf16.msra.mxu0 0
  %713 = vmatprep.subr.bf16.mxu0 0
  %714 = vmatpush1.bf16.msra.mxu0 0
  %715 = vmatprep.subr.bf16.mxu0 0
  %716 = vmatpush1.bf16.msra.mxu0 0
  %717 = vmatprep.subr.bf16.mxu0 0
  %718 = vmatpush1.bf16.msra.mxu0 0
  %719 = vmatprep.mubr.bf16.mxu0 0
  %720 = vmatmul.mubr.bf16.gmra.mrb[0].mxu0 %v685
  %v721 = vpop.f32.mrb[0].mxu0
  %v722 = vadd.f32 0.0, %v721
  %v723 = vpop.f32.mrb[0].mxu0
  %v724 = vadd.f32 0.0, %v723
  %v725 = vpop.f32.mrb[0].mxu0
  %v726 = vpop.f32.mrb[0].mxu0
  %727 = vdwg.mxu0
  %v728 = vadd.f32 %v681, %v722
  %v729 = vadd.f32 %v682, %v724
  %v730 = vxor.u32 %v728, 2147483648
  %v731 = vxor.u32 %v729, 2147483648
  %v732 = vmul.f32 %v730, 1.442695
  %v733 = vpow.pop %v732
  %v734 = vmul.f32 %v731, 1.442695
  %v735 = vpow.pop %v734
  %v736 = vadd.f32 %v733, 1.0
  %v737 = vadd.f32 %v735, 1.0
  %v738 = vrcp.pop %v736
  %v739 = vmul.f32 1.0, %v738
  %v740 = vrcp.pop %v737
  %v741 = vmul.f32 1.0, %v740
  %v742 = vtanh.pop %v729
  %744 = vrot.lane.b32.xlu0 %v680, 64
  %v745 = vpop.permute.xlu0 %744
  %v747 = vmul.f32 %v739, %v745
  %749 = vrot.lane.b32.xlu0 %v742, 64
  %v750 = vpop.permute.xlu0 %749
  %v752 = vmul.f32 %v739, %v750
  %754 = vrot.lane.b32.xlu0 %v752, 64
  %v755 = vpop.permute.xlu0 %754
  %v757 = vadd.f32 %v747, %v755
  %v758 = vtanh.pop %v757
  %760 = vrot.lane.b32.xlu0 %v758, 64
  %v761 = vpop.permute.xlu0 %760
  %v763 = vmul.f32 %v741, %v761
  %v764 = vsel %vm277, %v763, %v675
  %766 = vrot.lane.b32.xlu0 %v757, 64
  %v767 = vpop.permute.xlu0 %766
  %v769 = vsel %vm277, %v767, %v680
  %v770 = vsel %vm263, %v224, %v210
  %v771 = vsel %vm264, %v226, %v212
  %v772 = vpack.c.bf16 %v764, %v764
  %v774 = vsel %vm331, %v772, 0
  %776 = vmatprep.subr.bf16.mxu0 %v316
  %777 = vmatpush1.bf16.msra.mxu0 %v315
  %778 = vmatprep.subr.bf16.mxu0 %v318
  %779 = vmatpush1.bf16.msra.mxu0 %v317
  %780 = vmatprep.subr.bf16.mxu0 %v320
  %781 = vmatpush1.bf16.msra.mxu0 %v319
  %782 = vmatprep.subr.bf16.mxu0 %v322
  %783 = vmatpush1.bf16.msra.mxu0 %v321
  %784 = vmatprep.subr.bf16.mxu0 0
  %785 = vmatpush1.bf16.msra.mxu0 0
  %786 = vmatprep.subr.bf16.mxu0 0
  %787 = vmatpush1.bf16.msra.mxu0 0
  %788 = vmatprep.subr.bf16.mxu0 0
  %789 = vmatpush1.bf16.msra.mxu0 0
  %790 = vmatprep.subr.bf16.mxu0 0
  %791 = vmatpush1.bf16.msra.mxu0 0
  %792 = vmatprep.subr.bf16.mxu0 0
  %793 = vmatpush1.bf16.msra.mxu0 0
  %794 = vmatprep.subr.bf16.mxu0 0
  %795 = vmatpush1.bf16.msra.mxu0 0
  %796 = vmatprep.subr.bf16.mxu0 0
  %797 = vmatpush1.bf16.msra.mxu0 0
  %798 = vmatprep.subr.bf16.mxu0 0
  %799 = vmatpush1.bf16.msra.mxu0 0
  %800 = vmatprep.subr.bf16.mxu0 0
  %801 = vmatpush1.bf16.msra.mxu0 0
  %802 = vmatprep.subr.bf16.mxu0 0
  %803 = vmatpush1.bf16.msra.mxu0 0
  %804 = vmatprep.subr.bf16.mxu0 0
  %805 = vmatpush1.bf16.msra.mxu0 0
  %806 = vmatprep.subr.bf16.mxu0 0
  %807 = vmatpush1.bf16.msra.mxu0 0
  %808 = vmatprep.mubr.bf16.mxu0 0
  %809 = vmatmul.mubr.bf16.gmra.mrb[0].mxu0 %v774
  %v810 = vpop.f32.mrb[0].mxu0
  %v811 = vadd.f32 0.0, %v810
  %v812 = vpop.f32.mrb[0].mxu0
  %v813 = vadd.f32 0.0, %v812
  %v814 = vpop.f32.mrb[0].mxu0
  %v815 = vpop.f32.mrb[0].mxu0
  %816 = vdwg.mxu0
  %v817 = vadd.f32 %v770, %v811
  %v818 = vadd.f32 %v771, %v813
  %v819 = vxor.u32 %v817, 2147483648
  %v820 = vxor.u32 %v818, 2147483648
  %v821 = vmul.f32 %v819, 1.442695
  %v822 = vpow.pop %v821
  %v823 = vmul.f32 %v820, 1.442695
  %v824 = vpow.pop %v823
  %v825 = vadd.f32 %v822, 1.0
  %v826 = vadd.f32 %v824, 1.0
  %v827 = vrcp.pop %v825
  %v828 = vmul.f32 1.0, %v827
  %v829 = vrcp.pop %v826
  %v830 = vmul.f32 1.0, %v829
  %v831 = vtanh.pop %v818
  %833 = vrot.lane.b32.xlu0 %v769, 64
  %v834 = vpop.permute.xlu0 %833
  %v836 = vmul.f32 %v828, %v834
  %838 = vrot.lane.b32.xlu0 %v831, 64
  %v839 = vpop.permute.xlu0 %838
  %v841 = vmul.f32 %v828, %v839
  %843 = vrot.lane.b32.xlu0 %v841, 64
  %v844 = vpop.permute.xlu0 %843
  %v846 = vadd.f32 %v836, %v844
  %v847 = vtanh.pop %v846
  %849 = vrot.lane.b32.xlu0 %v847, 64
  %v850 = vpop.permute.xlu0 %849
  %v852 = vmul.f32 %v830, %v850
  %v853 = vsel %vm278, %v852, %v764
  %855 = vrot.lane.b32.xlu0 %v846, 64
  %v856 = vpop.permute.xlu0 %855
  %v858 = vsel %vm278, %v856, %v769
  %v859 = vsel %vm263, %v230, %v204
  %v860 = vsel %vm264, %v232, %v206
  %v861 = vpack.c.bf16 %v853, %v853
  %v863 = vsel %vm331, %v861, 0
  %865 = vmatprep.subr.bf16.mxu0 %v316
  %866 = vmatpush1.bf16.msra.mxu0 %v315
  %867 = vmatprep.subr.bf16.mxu0 %v318
  %868 = vmatpush1.bf16.msra.mxu0 %v317
  %869 = vmatprep.subr.bf16.mxu0 %v320
  %870 = vmatpush1.bf16.msra.mxu0 %v319
  %871 = vmatprep.subr.bf16.mxu0 %v322
  %872 = vmatpush1.bf16.msra.mxu0 %v321
  %873 = vmatprep.subr.bf16.mxu0 0
  %874 = vmatpush1.bf16.msra.mxu0 0
  %875 = vmatprep.subr.bf16.mxu0 0
  %876 = vmatpush1.bf16.msra.mxu0 0
  %877 = vmatprep.subr.bf16.mxu0 0
  %878 = vmatpush1.bf16.msra.mxu0 0
  %879 = vmatprep.subr.bf16.mxu0 0
  %880 = vmatpush1.bf16.msra.mxu0 0
  %881 = vmatprep.subr.bf16.mxu0 0
  %882 = vmatpush1.bf16.msra.mxu0 0
  %883 = vmatprep.subr.bf16.mxu0 0
  %884 = vmatpush1.bf16.msra.mxu0 0
  %885 = vmatprep.subr.bf16.mxu0 0
  %886 = vmatpush1.bf16.msra.mxu0 0
  %887 = vmatprep.subr.bf16.mxu0 0
  %888 = vmatpush1.bf16.msra.mxu0 0
  %889 = vmatprep.subr.bf16.mxu0 0
  %890 = vmatpush1.bf16.msra.mxu0 0
  %891 = vmatprep.subr.bf16.mxu0 0
  %892 = vmatpush1.bf16.msra.mxu0 0
  %893 = vmatprep.subr.bf16.mxu0 0
  %894 = vmatpush1.bf16.msra.mxu0 0
  %895 = vmatprep.subr.bf16.mxu0 0
  %896 = vmatpush1.bf16.msra.mxu0 0
  %897 = vmatprep.mubr.bf16.mxu0 0
  %898 = vmatmul.mubr.bf16.gmra.mrb[0].mxu0 %v863
  %v899 = vpop.f32.mrb[0].mxu0
  %v900 = vadd.f32 0.0, %v899
  %v901 = vpop.f32.mrb[0].mxu0
  %v902 = vadd.f32 0.0, %v901
  %v903 = vpop.f32.mrb[0].mxu0
  %v904 = vpop.f32.mrb[0].mxu0
  %905 = vdwg.mxu0
  %v906 = vadd.f32 %v859, %v900
  %v907 = vadd.f32 %v860, %v902
  %v908 = vxor.u32 %v906, 2147483648
  %v909 = vxor.u32 %v907, 2147483648
  %v910 = vmul.f32 %v908, 1.442695
  %v911 = vpow.pop %v910
  %v912 = vmul.f32 %v909, 1.442695
  %v913 = vpow.pop %v912
  %v914 = vadd.f32 %v911, 1.0
  %v915 = vadd.f32 %v913, 1.0
  %v916 = vrcp.pop %v914
  %v917 = vmul.f32 1.0, %v916
  %v918 = vrcp.pop %v915
  %v919 = vmul.f32 1.0, %v918
  %v920 = vtanh.pop %v907
  %922 = vrot.lane.b32.xlu0 %v858, 64
  %v923 = vpop.permute.xlu0 %922
  %v925 = vmul.f32 %v917, %v923
  %927 = vrot.lane.b32.xlu0 %v920, 64
  %v928 = vpop.permute.xlu0 %927
  %v930 = vmul.f32 %v917, %v928
  %932 = vrot.lane.b32.xlu0 %v930, 64
  %v933 = vpop.permute.xlu0 %932
  %v935 = vadd.f32 %v925, %v933
  %v936 = vtanh.pop %v935
  %938 = vrot.lane.b32.xlu0 %v936, 64
  %v939 = vpop.permute.xlu0 %938
  %v941 = vmul.f32 %v919, %v939
  %v942 = vsel %vm279, %v941, %v853
  %944 = vrot.lane.b32.xlu0 %v935, 64
  %v945 = vpop.permute.xlu0 %944
  %v947 = vsel %vm279, %v945, %v858
  %v948 = vsel %vm263, %v234, %v200
  %v949 = vsel %vm264, %v236, %v202
  %v950 = vpack.c.bf16 %v942, %v942
  %v952 = vsel %vm331, %v950, 0
  %954 = vmatprep.subr.bf16.mxu0 %v316
  %955 = vmatpush1.bf16.msra.mxu0 %v315
  %956 = vmatprep.subr.bf16.mxu0 %v318
  %957 = vmatpush1.bf16.msra.mxu0 %v317
  %958 = vmatprep.subr.bf16.mxu0 %v320
  %959 = vmatpush1.bf16.msra.mxu0 %v319
  %960 = vmatprep.subr.bf16.mxu0 %v322
  %961 = vmatpush1.bf16.msra.mxu0 %v321
  %962 = vmatprep.subr.bf16.mxu0 0
  %963 = vmatpush1.bf16.msra.mxu0 0
  %964 = vmatprep.subr.bf16.mxu0 0
  %965 = vmatpush1.bf16.msra.mxu0 0
  %966 = vmatprep.subr.bf16.mxu0 0
  %967 = vmatpush1.bf16.msra.mxu0 0
  %968 = vmatprep.subr.bf16.mxu0 0
  %969 = vmatpush1.bf16.msra.mxu0 0
  %970 = vmatprep.subr.bf16.mxu0 0
  %971 = vmatpush1.bf16.msra.mxu0 0
  %972 = vmatprep.subr.bf16.mxu0 0
  %973 = vmatpush1.bf16.msra.mxu0 0
  %974 = vmatprep.subr.bf16.mxu0 0
  %975 = vmatpush1.bf16.msra.mxu0 0
  %976 = vmatprep.subr.bf16.mxu0 0
  %977 = vmatpush1.bf16.msra.mxu0 0
  %978 = vmatprep.subr.bf16.mxu0 0
  %979 = vmatpush1.bf16.msra.mxu0 0
  %980 = vmatprep.subr.bf16.mxu0 0
  %981 = vmatpush1.bf16.msra.mxu0 0
  %982 = vmatprep.subr.bf16.mxu0 0
  %983 = vmatpush1.bf16.msra.mxu0 0
  %984 = vmatprep.subr.bf16.mxu0 0
  %985 = vmatpush1.bf16.msra.mxu0 0
  %986 = vmatprep.mubr.bf16.mxu0 0
  %987 = vmatmul.mubr.bf16.gmra.mrb[0].mxu0 %v952
  %v988 = vpop.f32.mrb[0].mxu0
  %v989 = vadd.f32 0.0, %v988
  %v990 = vpop.f32.mrb[0].mxu0
  %v991 = vadd.f32 0.0, %v990
  %v992 = vpop.f32.mrb[0].mxu0
  %v993 = vpop.f32.mrb[0].mxu0
  %994 = vdwg.mxu0
  %v995 = vadd.f32 %v948, %v989
  %v996 = vadd.f32 %v949, %v991
  %v997 = vxor.u32 %v995, 2147483648
  %v998 = vxor.u32 %v996, 2147483648
  %v999 = vmul.f32 %v997, 1.442695
  %v1000 = vpow.pop %v999
  %v1001 = vmul.f32 %v998, 1.442695
  %v1002 = vpow.pop %v1001
  %v1003 = vadd.f32 %v1000, 1.0
  %v1004 = vadd.f32 %v1002, 1.0
  %v1005 = vrcp.pop %v1003
  %v1006 = vmul.f32 1.0, %v1005
  %v1007 = vrcp.pop %v1004
  %v1008 = vmul.f32 1.0, %v1007
  %v1009 = vtanh.pop %v996
  %1011 = vrot.lane.b32.xlu0 %v947, 64
  %v1012 = vpop.permute.xlu0 %1011
  %v1014 = vmul.f32 %v1006, %v1012
  %1016 = vrot.lane.b32.xlu0 %v1009, 64
  %v1017 = vpop.permute.xlu0 %1016
  %v1019 = vmul.f32 %v1006, %v1017
  %1021 = vrot.lane.b32.xlu0 %v1019, 64
  %v1022 = vpop.permute.xlu0 %1021
  %v1024 = vadd.f32 %v1014, %v1022
  %v1025 = vtanh.pop %v1024
  %1027 = vrot.lane.b32.xlu0 %v1025, 64
  %v1028 = vpop.permute.xlu0 %1027
  %v1030 = vmul.f32 %v1008, %v1028
  %v1031 = vsel %vm280, %v1030, %v942
  %v1032 = vld [vmem:[%s5] sm:$0xff]
  %v1033 = vld [vmem:[%s5 + $0x8] sm:$0xff]
  %v1034 = vld [vmem:[%s5 + $0x10] sm:$0xff]
  %v1035 = vld [vmem:[%s5 + $0x18] sm:$0xff]
  %v1036 = vld [vmem:[%s5 + $0x20] sm:$0xff]
  %v1037 = vld [vmem:[%s5 + $0x28] sm:$0xff]
  %v1038 = vld [vmem:[%s5 + $0x30] sm:$0xff]
  %v1039 = vld [vmem:[%s5 + $0x38] sm:$0xff]
  %v1040 = vld [vmem:[#allocation2] sm:$0x1]
  %v1042 = vlaneseq
  %v1043 = vshrl.u32 %v1042, 7
  %v1044 = vsub.s32 0, %v1043
  %v1045 = vrot.slane %v1040, %v1044
  %v1048 = vsel %vm331, %v1031, 0
  %1050 = vmatprep.subr.mxu0 0.0
  %1051 = vmatpush1.msra.mxu0 %v1032
  %1052 = vmatprep.subr.mxu0 0.0
  %1053 = vmatpush1.msra.mxu0 %v1033
  %1054 = vmatprep.subr.mxu0 0.0
  %1055 = vmatpush1.msra.mxu0 %v1034
  %1056 = vmatprep.subr.mxu0 0.0
  %1057 = vmatpush1.msra.mxu0 %v1035
  %1058 = vmatprep.subr.mxu0 0.0
  %1059 = vmatpush1.msra.mxu0 %v1036
  %1060 = vmatprep.subr.mxu0 0.0
  %1061 = vmatpush1.msra.mxu0 %v1037
  %1062 = vmatprep.subr.mxu0 0.0
  %1063 = vmatpush1.msra.mxu0 %v1038
  %1064 = vmatprep.subr.mxu0 0.0
  %1065 = vmatpush1.msra.mxu0 %v1039
  %1066 = vmatprep.subr.mxu0 0.0
  %1067 = vmatpush1.msra.mxu0 0.0
  %1068 = vmatprep.subr.mxu0 0.0
  %1069 = vmatpush1.msra.mxu0 0.0
  %1070 = vmatprep.subr.mxu0 0.0
  %1071 = vmatpush1.msra.mxu0 0.0
  %1072 = vmatprep.subr.mxu0 0.0
  %1073 = vmatpush1.msra.mxu0 0.0
  %1074 = vmatprep.subr.mxu0 0.0
  %1075 = vmatpush1.msra.mxu0 0.0
  %1076 = vmatprep.subr.mxu0 0.0
  %1077 = vmatpush1.msra.mxu0 0.0
  %1078 = vmatprep.subr.mxu0 0.0
  %1079 = vmatpush1.msra.mxu0 0.0
  %1080 = vmatprep.subr.mxu0 0.0
  %1081 = vmatpush1.msra.mxu0 0.0
  %1082 = vmatprep.subr.mxu0 0.0
  %1083 = vmatpush1.msra.mxu0 0.0
  %1084 = vmatprep.subr.mxu0 0.0
  %1085 = vmatpush1.msra.mxu0 0.0
  %1086 = vmatprep.subr.mxu0 0.0
  %1087 = vmatpush1.msra.mxu0 0.0
  %1088 = vmatprep.subr.mxu0 0.0
  %1089 = vmatpush1.msra.mxu0 0.0
  %1090 = vmatprep.subr.mxu0 0.0
  %1091 = vmatpush1.msra.mxu0 0.0
  %1092 = vmatprep.subr.mxu0 0.0
  %1093 = vmatpush1.msra.mxu0 0.0
  %1094 = vmatprep.subr.mxu0 0.0
  %1095 = vmatpush1.msra.mxu0 0.0
  %1096 = vmatprep.subr.mxu0 0.0
  %1097 = vmatpush1.msra.mxu0 0.0
  %1098 = vmatprep.subr.mxu0 0.0
  %1099 = vmatpush1.msra.mxu0 0.0
  %1100 = vmatprep.subr.mxu0 0.0
  %1101 = vmatpush1.msra.mxu0 0.0
  %1102 = vmatprep.subr.mxu0 0.0
  %1103 = vmatpush1.msra.mxu0 0.0
  %1104 = vmatprep.subr.mxu0 0.0
  %1105 = vmatpush1.msra.mxu0 0.0
  %1106 = vmatprep.subr.mxu0 0.0
  %1107 = vmatpush1.msra.mxu0 0.0
  %1108 = vmatprep.subr.mxu0 0.0
  %1109 = vmatpush1.msra.mxu0 0.0
  %1110 = vmatprep.subr.mxu0 0.0
  %1111 = vmatpush1.msra.mxu0 0.0
  %1112 = vmatprep.subr.mxu0 0.0
  %1113 = vmatpush1.msra.mxu0 0.0
  %1114 = vmatprep.mubr.f32.mxu0 0.0
  %1115 = vmatmul.mubr.f32.gmra.mrb[0].mxu0 %v1048
  %v1116 = vpop.f32.mrb[0].mxu0
  %v1117 = vadd.f32 %v1045, %v1116
  %v1118 = vpop.f32.mrb[0].mxu0
  %1119 = vdwg.mxu0
  %v1120 = vxor.u32 %v1117, 2147483648
  %v1121 = vmul.f32 %v1120, 1.442695
  %v1122 = vpow.pop %v1121
  %v1123 = vadd.f32 %v1122, 1.0
  %v1124 = vrcp.pop %v1123
  %v1125 = vmul.f32 1.0, %v1124
  %vm1126 = vcmask 7168
  %1127 = vst.msk [vmem:[%s7] sm:$0xff] %vm1126, %v1125
  // Predicated region
  $region30: #{classifier_forward.1} parent=0 // pred_check
    _
  $region31: #{classifier_forward.1} parent=0 // pred_check_branch
    %1129 = sbr.rel (0) target = $region33
  $region32: #{classifier_forward.1} parent=0 // pred_region
    _
  $region33: #{classifier_forward.1} parent=0 // pred_fallthru
    _
  // Predicated region
  $region34: #{classifier_forward.1} parent=0 // pred_check
    _
  $region35: #{classifier_forward.1} parent=0 // pred_check_branch
    %1131 = sbr.rel (0) target = $region37
  $region36: #{classifier_forward.1} parent=0 // pred_region
    _
  $region37: #{classifier_forward.1} parent=0 // pred_fallthru
    _

</llo_original>
